<compile_context>
chip_gen: v5e
topology: v5e:2x2
jax: 0.10.0
libtpu: 0.0.40
codegen_flags: <defaults>
</compile_context>

<pallas_src>
import jax
import jax.numpy as jnp
from jax.experimental import pallas as pl
from jax.experimental.pallas import tpu as pltpu

NUM_NEURONS = 512
DROPOUT = 0.2            # unused at inference (identity); kept for documentation
SUBLANE_BF16 = 16        # bf16 packs 2 rows per sublane -> 16-row granularity
MAX_TILE_B = 1024        # batch tile cap for large batches


def _round_up(n, m):
    return ((n + m - 1) // m) * m


def _choose_tile_b(B):
    """Pick a 16-row-aligned batch tile.

    Small batches: single minimally padded tile.  Larger batches: aim for at
    least 2 grid steps (so both TensorCores run on v7x via the 'parallel'
    batch axis) while capping the tile at MAX_TILE_B to bound VMEM and keep
    activation DMA pipelined against compute.
    """
    b_pad = _round_up(B, SUBLANE_BF16)
    if b_pad <= 2 * SUBLANE_BF16:
        return b_pad  # tiny batch: splitting would only add per-step overhead
    half = _round_up((b_pad + 1) // 2, SUBLANE_BF16)
    return min(MAX_TILE_B, half)


def _dqn_kernel(x_ref,
                w1_ref, b1_ref,
                w2_ref, b2_ref,
                w3_ref, b3_ref,
                w4_ref, b4_ref,
                w5_ref, b5_ref,
                o_ref):
    """Fused 5-layer MLP on one [tile_b, n_in] batch tile.

    bf16 operands on the MXU, f32 accumulation, f32 bias-add + ReLU on the VPU.
    """
    h = x_ref[...]  # bf16 [tile_b, n_in]

    h = jnp.dot(h, w1_ref[...], preferred_element_type=jnp.float32) + b1_ref[...]
    h = jnp.maximum(h, 0.0).astype(jnp.bfloat16)
    # TODO(synk): training-mode dropout (stochastic masking) not implemented;
    # inference/eval semantics (identity) are used instead.

    h = jnp.dot(h, w2_ref[...], preferred_element_type=jnp.float32) + b2_ref[...]
    h = jnp.maximum(h, 0.0).astype(jnp.bfloat16)

    h = jnp.dot(h, w3_ref[...], preferred_element_type=jnp.float32) + b3_ref[...]
    h = jnp.maximum(h, 0.0).astype(jnp.bfloat16)

    h = jnp.dot(h, w4_ref[...], preferred_element_type=jnp.float32) + b4_ref[...]
    h = jnp.maximum(h, 0.0).astype(jnp.bfloat16)

    out = jnp.dot(h, w5_ref[...], preferred_element_type=jnp.float32) + b5_ref[...]
    o_ref[...] = out  # f32 [tile_b, n_out]


def prepare_params(params):
    """One-time weight prep (do NOT call per forward pass).

    Casts [in, out] weights to bf16 (MXU-native operand dtype); biases stay
    f32.  Call once after (re)loading / updating the weights and reuse the
    result for every dqn_forward call.
    """
    prepped = {}
    for i in range(1, 6):
        prepped[f"w{i}"] = params[f"w{i}"].astype(jnp.bfloat16)
        prepped[f"b{i}"] = params[f"b{i}"].astype(jnp.float32)
    return prepped


@jax.jit
def dqn_forward(x, prepped):
    """x: [B, numberOfInputs] f32; prepped: output of prepare_params().

    Returns [B, numberOfOutputs] f32 Q-values (eval-mode forward).
    """
    B, n_in = x.shape
    n_out = prepped["w5"].shape[1]

    tile_b = _choose_tile_b(B)
    b_pad = _round_up(B, tile_b)
    x_p = jnp.pad(x, ((0, b_pad - B), (0, 0))).astype(jnp.bfloat16)

    grid = (b_pad // tile_b,)

    def resident(shape):
        # Constant index map -> block fetched once, kept VMEM-resident across
        # all grid steps (Pallas skips re-DMA when the block index repeats).
        return pl.BlockSpec(shape, lambda i: (0, 0))

    w1, b1 = prepped["w1"], prepped["b1"]
    w2, b2 = prepped["w2"], prepped["b2"]
    w3, b3 = prepped["w3"], prepped["b3"]
    w4, b4 = prepped["w4"], prepped["b4"]
    w5, b5 = prepped["w5"], prepped["b5"]

    in_specs = [
        pl.BlockSpec((tile_b, n_in), lambda i: (i, 0)),   # x: per-tile stream
        resident(w1.shape), resident(b1.shape),
        resident(w2.shape), resident(b2.shape),
        resident(w3.shape), resident(b3.shape),
        resident(w4.shape), resident(b4.shape),
        resident(w5.shape), resident(b5.shape),
    ]

    out = pl.pallas_call(
        _dqn_kernel,
        out_shape=jax.ShapeDtypeStruct((b_pad, n_out), jnp.float32),
        grid=grid,
        in_specs=in_specs,
        out_specs=pl.BlockSpec((tile_b, n_out), lambda i: (i, 0)),
        compiler_params=pltpu.CompilerParams(
            dimension_semantics=("parallel",),
        ),
    )(x_p, w1, b1, w2, b2, w3, b3, w4, b4, w5, b5)

    # Row slice only (no lane padding to strip); identity when B == b_pad.
    return out[:B]


def init_params(key, number_of_inputs, number_of_outputs, neurons=NUM_NEURONS):
    """Deterministic synthetic init (uniform, PyTorch-Linear-like fan_in bound).

    Weights are stored as [in, out] (transpose of nn.Linear's [out, in]).
    """
    dims = [(number_of_inputs, neurons),
            (neurons, neurons),
            (neurons, neurons),
            (neurons, neurons),
            (neurons, number_of_outputs)]
    params = {}
    keys = jax.random.split(key, 2 * len(dims))
    for i, (fan_in, fan_out) in enumerate(dims):
        bound = 1.0 / jnp.sqrt(fan_in)
        params[f"w{i+1}"] = jax.random.uniform(
            keys[2 * i], (fan_in, fan_out), jnp.float32, -bound, bound)
        params[f"b{i+1}"] = jax.random.uniform(
            keys[2 * i + 1], (1, fan_out), jnp.float32, -bound, bound)
    return params


def dqn_reference_bf16(x, params):
    """Plain-JAX reference mirroring the kernel's bf16 quantization scheme."""
    h = x.astype(jnp.bfloat16)
    for i in range(1, 5):
        w = params[f"w{i}"].astype(jnp.bfloat16)
        h = jnp.dot(h, w, preferred_element_type=jnp.float32) + params[f"b{i}"]
        h = jnp.maximum(h, 0.0).astype(jnp.bfloat16)
    w5 = params["w5"].astype(jnp.bfloat16)
    return jnp.dot(h, w5, preferred_element_type=jnp.float32) + params["b5"]


def dqn_reference_f32(x, params):
    """Full-precision reference (original module semantics, eval mode)."""
    h = jnp.maximum(x @ params["w1"] + params["b1"], 0.0)
    h = jnp.maximum(h @ params["w2"] + params["b2"], 0.0)
    h = jnp.maximum(h @ params["w3"] + params["b3"], 0.0)
    h = jnp.maximum(h @ params["w4"] + params["b4"], 0.0)
    return h @ params["w5"] + params["b5"]


if __name__ == "__main__":
    number_of_inputs = 16   # e.g. stock feature vector length
    number_of_outputs = 8   # number of actions
    batch = 2

    key = jax.random.PRNGKey(0)
    k_x, k_p = jax.random.split(key)
    x = jax.random.normal(k_x, (batch, number_of_inputs), dtype=jnp.float32)
    params = init_params(k_p, number_of_inputs, number_of_outputs)

    # One-time weight prep (bf16 cast) outside the per-call path.
    prepped = prepare_params(params)

    out = dqn_forward(x, prepped)
    out = jax.block_until_ready(out)
    assert out.shape == (batch, number_of_outputs)

    # Tight check vs a reference using the same bf16 weight/activation scheme.
    ref_bf16 = dqn_reference_bf16(x, params)
    assert jnp.allclose(out, ref_bf16, atol=1e-2, rtol=1e-2), \
        "mismatch vs bf16 reference"

    # Loose sanity check vs the full-f32 module semantics.
    ref_f32 = dqn_reference_f32(x, params)
    assert jnp.allclose(out, ref_f32, atol=8e-2, rtol=8e-2), \
        "mismatch vs f32 reference beyond bf16 tolerance"

    print("KERNEL_OK")
</pallas_src>

<mosaic_0001>
module attributes {stable_mosaic.version = 11 : i64} {
  func.func @_dqn_kernel(%arg0: i32, %arg1: memref<16x16xbf16, #tpu.memory_space<vmem>>, %arg2: memref<16x512xbf16, #tpu.memory_space<vmem>>, %arg3: memref<1x512xf32, #tpu.memory_space<vmem>>, %arg4: memref<512x512xbf16, #tpu.memory_space<vmem>>, %arg5: memref<1x512xf32, #tpu.memory_space<vmem>>, %arg6: memref<512x512xbf16, #tpu.memory_space<vmem>>, %arg7: memref<1x512xf32, #tpu.memory_space<vmem>>, %arg8: memref<512x512xbf16, #tpu.memory_space<vmem>>, %arg9: memref<1x512xf32, #tpu.memory_space<vmem>>, %arg10: memref<512x8xbf16, #tpu.memory_space<vmem>>, %arg11: memref<1x8xf32, #tpu.memory_space<vmem>>, %arg12: memref<16x8xf32, #tpu.memory_space<vmem>>) attributes {dimension_semantics = [#tpu.dimension_semantics<parallel>], iteration_bounds = array<i64: 1>, scalar_prefetch = 0 : i64, scratch_operands = 0 : i64, tpu.core_type = #tpu.core_type<tc>, window_params = [{transform_indices = @transform_0, window_bounds = array<i64: 16, 16>}, {pipeline_mode = #tpu.pipeline_mode<synchronous>, transform_indices = @transform_1, window_bounds = array<i64: 16, 512>}, {pipeline_mode = #tpu.pipeline_mode<synchronous>, transform_indices = @transform_2, window_bounds = array<i64: 1, 512>}, {pipeline_mode = #tpu.pipeline_mode<synchronous>, transform_indices = @transform_3, window_bounds = array<i64: 512, 512>}, {pipeline_mode = #tpu.pipeline_mode<synchronous>, transform_indices = @transform_4, window_bounds = array<i64: 1, 512>}, {pipeline_mode = #tpu.pipeline_mode<synchronous>, transform_indices = @transform_5, window_bounds = array<i64: 512, 512>}, {pipeline_mode = #tpu.pipeline_mode<synchronous>, transform_indices = @transform_6, window_bounds = array<i64: 1, 512>}, {pipeline_mode = #tpu.pipeline_mode<synchronous>, transform_indices = @transform_7, window_bounds = array<i64: 512, 512>}, {pipeline_mode = #tpu.pipeline_mode<synchronous>, transform_indices = @transform_8, window_bounds = array<i64: 1, 512>}, {pipeline_mode = #tpu.pipeline_mode<synchronous>, transform_indices = @transform_9, window_bounds = array<i64: 512, 8>}, {pipeline_mode = #tpu.pipeline_mode<synchronous>, transform_indices = @transform_10, window_bounds = array<i64: 1, 8>}, {transform_indices = @transform_11, window_bounds = array<i64: 16, 8>}]} {
    %c0 = arith.constant 0 : index
    %c0_0 = arith.constant 0 : index
    %0 = vector.load %arg1[%c0, %c0_0] : memref<16x16xbf16, #tpu.memory_space<vmem>>, vector<16x16xbf16>
    %c0_1 = arith.constant 0 : index
    %c0_2 = arith.constant 0 : index
    %1 = vector.load %arg2[%c0_1, %c0_2] : memref<16x512xbf16, #tpu.memory_space<vmem>>, vector<16x512xbf16>
    %cst = arith.constant dense<0.000000e+00> : vector<16x512xf32>
    %2 = tpu.matmul %0, %1, %cst {dimension_numbers = #tpu.dot_dimension_numbers<[1], [0], [0], [1], [0, 0, 1, 1], [], []>} : vector<16x16xbf16>, vector<16x512xbf16>, vector<16x512xf32> -> vector<16x512xf32>
    %c0_3 = arith.constant 0 : index
    %c0_4 = arith.constant 0 : index
    %3 = vector.load %arg3[%c0_3, %c0_4] : memref<1x512xf32, #tpu.memory_space<vmem>>, vector<1x512xf32>
    %4 = vector.broadcast %3 : vector<1x512xf32> to vector<16x512xf32>
    %5 = arith.addf %2, %4 : vector<16x512xf32>
    %cst_5 = arith.constant 0.000000e+00 : f32
    %6 = vector.broadcast %cst_5 : f32 to vector<16x512xf32>
    %7 = arith.maximumf %5, %6 : vector<16x512xf32>
    %8 = arith.truncf %7 : vector<16x512xf32> to vector<16x512xbf16>
    %c0_6 = arith.constant 0 : index
    %c0_7 = arith.constant 0 : index
    %9 = vector.load %arg4[%c0_6, %c0_7] : memref<512x512xbf16, #tpu.memory_space<vmem>>, vector<512x512xbf16>
    %cst_8 = arith.constant dense<0.000000e+00> : vector<16x512xf32>
    %10 = tpu.matmul %8, %9, %cst_8 {dimension_numbers = #tpu.dot_dimension_numbers<[1], [0], [0], [1], [0, 0, 1, 1], [], []>} : vector<16x512xbf16>, vector<512x512xbf16>, vector<16x512xf32> -> vector<16x512xf32>
    %c0_9 = arith.constant 0 : index
    %c0_10 = arith.constant 0 : index
    %11 = vector.load %arg5[%c0_9, %c0_10] : memref<1x512xf32, #tpu.memory_space<vmem>>, vector<1x512xf32>
    %12 = vector.broadcast %11 : vector<1x512xf32> to vector<16x512xf32>
    %13 = arith.addf %10, %12 : vector<16x512xf32>
    %cst_11 = arith.constant 0.000000e+00 : f32
    %14 = vector.broadcast %cst_11 : f32 to vector<16x512xf32>
    %15 = arith.maximumf %13, %14 : vector<16x512xf32>
    %16 = arith.truncf %15 : vector<16x512xf32> to vector<16x512xbf16>
    %c0_12 = arith.constant 0 : index
    %c0_13 = arith.constant 0 : index
    %17 = vector.load %arg6[%c0_12, %c0_13] : memref<512x512xbf16, #tpu.memory_space<vmem>>, vector<512x512xbf16>
    %cst_14 = arith.constant dense<0.000000e+00> : vector<16x512xf32>
    %18 = tpu.matmul %16, %17, %cst_14 {dimension_numbers = #tpu.dot_dimension_numbers<[1], [0], [0], [1], [0, 0, 1, 1], [], []>} : vector<16x512xbf16>, vector<512x512xbf16>, vector<16x512xf32> -> vector<16x512xf32>
    %c0_15 = arith.constant 0 : index
    %c0_16 = arith.constant 0 : index
    %19 = vector.load %arg7[%c0_15, %c0_16] : memref<1x512xf32, #tpu.memory_space<vmem>>, vector<1x512xf32>
    %20 = vector.broadcast %19 : vector<1x512xf32> to vector<16x512xf32>
    %21 = arith.addf %18, %20 : vector<16x512xf32>
    %cst_17 = arith.constant 0.000000e+00 : f32
    %22 = vector.broadcast %cst_17 : f32 to vector<16x512xf32>
    %23 = arith.maximumf %21, %22 : vector<16x512xf32>
    %24 = arith.truncf %23 : vector<16x512xf32> to vector<16x512xbf16>
    %c0_18 = arith.constant 0 : index
    %c0_19 = arith.constant 0 : index
    %25 = vector.load %arg8[%c0_18, %c0_19] : memref<512x512xbf16, #tpu.memory_space<vmem>>, vector<512x512xbf16>
    %cst_20 = arith.constant dense<0.000000e+00> : vector<16x512xf32>
    %26 = tpu.matmul %24, %25, %cst_20 {dimension_numbers = #tpu.dot_dimension_numbers<[1], [0], [0], [1], [0, 0, 1, 1], [], []>} : vector<16x512xbf16>, vector<512x512xbf16>, vector<16x512xf32> -> vector<16x512xf32>
    %c0_21 = arith.constant 0 : index
    %c0_22 = arith.constant 0 : index
    %27 = vector.load %arg9[%c0_21, %c0_22] : memref<1x512xf32, #tpu.memory_space<vmem>>, vector<1x512xf32>
    %28 = vector.broadcast %27 : vector<1x512xf32> to vector<16x512xf32>
    %29 = arith.addf %26, %28 : vector<16x512xf32>
    %cst_23 = arith.constant 0.000000e+00 : f32
    %30 = vector.broadcast %cst_23 : f32 to vector<16x512xf32>
    %31 = arith.maximumf %29, %30 : vector<16x512xf32>
    %32 = arith.truncf %31 : vector<16x512xf32> to vector<16x512xbf16>
    %c0_24 = arith.constant 0 : index
    %c0_25 = arith.constant 0 : index
    %33 = vector.load %arg10[%c0_24, %c0_25] : memref<512x8xbf16, #tpu.memory_space<vmem>>, vector<512x8xbf16>
    %cst_26 = arith.constant dense<0.000000e+00> : vector<16x8xf32>
    %34 = tpu.matmul %32, %33, %cst_26 {dimension_numbers = #tpu.dot_dimension_numbers<[1], [0], [0], [1], [0, 0, 1, 1], [], []>} : vector<16x512xbf16>, vector<512x8xbf16>, vector<16x8xf32> -> vector<16x8xf32>
    %c0_27 = arith.constant 0 : index
    %c0_28 = arith.constant 0 : index
    %35 = vector.load %arg11[%c0_27, %c0_28] : memref<1x8xf32, #tpu.memory_space<vmem>>, vector<1x8xf32>
    %36 = vector.broadcast %35 : vector<1x8xf32> to vector<16x8xf32>
    %37 = arith.addf %34, %36 : vector<16x8xf32>
    %c0_29 = arith.constant 0 : index
    %c0_30 = arith.constant 0 : index
    %38 = vector.load %arg12[%c0_29, %c0_30] : memref<16x8xf32, #tpu.memory_space<vmem>>, vector<16x8xf32>
    tpu.vector_store %arg12[%c0_29, %c0_30], %37 {strides = array<i32>} : memref<16x8xf32, #tpu.memory_space<vmem>>, vector<16x8xf32>,
    return
  }
  func.func @transform_0(%arg0: i32) -> (i32, i32) {
    %c0_i32 = arith.constant 0 : i32
    %c0_i32_0 = arith.constant 0 : i32
    return %arg0, %c0_i32 : i32, i32
  }
  func.func @transform_1(%arg0: i32) -> (i32, i32) {
    %c0_i32 = arith.constant 0 : i32
    %c0_i32_0 = arith.constant 0 : i32
    %c0_i32_1 = arith.constant 0 : i32
    return %c0_i32, %c0_i32_0 : i32, i32
  }
  func.func @transform_2(%arg0: i32) -> (i32, i32) {
    %c0_i32 = arith.constant 0 : i32
    %c0_i32_0 = arith.constant 0 : i32
    %c0_i32_1 = arith.constant 0 : i32
    return %c0_i32, %c0_i32_0 : i32, i32
  }
  func.func @transform_3(%arg0: i32) -> (i32, i32) {
    %c0_i32 = arith.constant 0 : i32
    %c0_i32_0 = arith.constant 0 : i32
    %c0_i32_1 = arith.constant 0 : i32
    return %c0_i32, %c0_i32_0 : i32, i32
  }
  func.func @transform_4(%arg0: i32) -> (i32, i32) {
    %c0_i32 = arith.constant 0 : i32
    %c0_i32_0 = arith.constant 0 : i32
    %c0_i32_1 = arith.constant 0 : i32
    return %c0_i32, %c0_i32_0 : i32, i32
  }
  func.func @transform_5(%arg0: i32) -> (i32, i32) {
    %c0_i32 = arith.constant 0 : i32
    %c0_i32_0 = arith.constant 0 : i32
    %c0_i32_1 = arith.constant 0 : i32
    return %c0_i32, %c0_i32_0 : i32, i32
  }
  func.func @transform_6(%arg0: i32) -> (i32, i32) {
    %c0_i32 = arith.constant 0 : i32
    %c0_i32_0 = arith.constant 0 : i32
    %c0_i32_1 = arith.constant 0 : i32
    return %c0_i32, %c0_i32_0 : i32, i32
  }
  func.func @transform_7(%arg0: i32) -> (i32, i32) {
    %c0_i32 = arith.constant 0 : i32
    %c0_i32_0 = arith.constant 0 : i32
    %c0_i32_1 = arith.constant 0 : i32
    return %c0_i32, %c0_i32_0 : i32, i32
  }
  func.func @transform_8(%arg0: i32) -> (i32, i32) {
    %c0_i32 = arith.constant 0 : i32
    %c0_i32_0 = arith.constant 0 : i32
    %c0_i32_1 = arith.constant 0 : i32
    return %c0_i32, %c0_i32_0 : i32, i32
  }
  func.func @transform_9(%arg0: i32) -> (i32, i32) {
    %c0_i32 = arith.constant 0 : i32
    %c0_i32_0 = arith.constant 0 : i32
    %c0_i32_1 = arith.constant 0 : i32
    return %c0_i32, %c0_i32_0 : i32, i32
  }
  func.func @transform_10(%arg0: i32) -> (i32, i32) {
    %c0_i32 = arith.constant 0 : i32
    %c0_i32_0 = arith.constant 0 : i32
    %c0_i32_1 = arith.constant 0 : i32
    return %c0_i32, %c0_i32_0 : i32, i32
  }
  func.func @transform_11(%arg0: i32) -> (i32, i32) {
    %c0_i32 = arith.constant 0 : i32
    %c0_i32_0 = arith.constant 0 : i32
    return %arg0, %c0_i32 : i32, i32
  }
}

</mosaic_0001>

<llo_original>
// kernel: dqn_forward.1
$region0: #{dqn_forward.1}
  #allocation0 [shape = 'u32[]', space=smem, size = 0x4, offset = 0x4, fixed_abs, tag = 'smem constant byte address 0x4 - core index']
  #allocation1 [shape = 'u32[72,128]{1,0:T(1,128)}', space=vmem, size = 0x9000, scoped, tag = 'internal scratch']
  %s0 = inlined_call_operand.vmem [shape: bf16[16,16], index: 0, kind: input, shape index: {}]
  %s1 = inlined_call_operand.vmem [shape: bf16[16,512], index: 1, kind: input, shape index: {}]
  %s2 = inlined_call_operand.vmem [shape: f32[1,512], index: 2, kind: input, shape index: {}]
  %s3 = inlined_call_operand.hbm [shape: bf16[512,512], index: 3, kind: input, shape index: {}]
  %s4 = inlined_call_operand.vmem [shape: f32[1,512], index: 4, kind: input, shape index: {}]
  %s5 = inlined_call_operand.hbm [shape: bf16[512,512], index: 5, kind: input, shape index: {}]
  %s6 = inlined_call_operand.vmem [shape: f32[1,512], index: 6, kind: input, shape index: {}]
  %s7 = inlined_call_operand.hbm [shape: bf16[512,512], index: 7, kind: input, shape index: {}]
  %s8 = inlined_call_operand.vmem [shape: f32[1,512], index: 8, kind: input, shape index: {}]
  %s9 = inlined_call_operand.vmem [shape: bf16[512,8], index: 9, kind: input, shape index: {}]
  %s10 = inlined_call_operand.vmem [shape: f32[1,8], index: 10, kind: input, shape index: {}]
  %s11 = inlined_call_operand.vmem [shape: f32[16,8], index: 11, kind: output, shape index: {}]
  %s12 = sld [smem:[#allocation0]]
  $region66: #{dqn_forward.1} parent=0
    _
  %s14 = ssub.s32 1, %s12
  %s15 = scalar_select 0, %s14, %s12
  $region1: #{dqn_forward.1} parent=0
    #allocation2 [shape = 'u8[524288]{0}', space=vmem, size = 0x80000, scoped, tag = 'input window, operand 3, single buffered']
    #allocation3 [shape = 's32[1]{0}', space=sflag, size = 0x4, scoped, tag = 'scoped memory for dqn_forward.1']
    #allocation4 [shape = 'u8[524288]{0}', space=vmem, size = 0x80000, scoped, tag = 'input window, operand 5, single buffered']
    #allocation5 [shape = 's32[1]{0}', space=sflag, size = 0x4, scoped, tag = 'scoped memory for dqn_forward.1']
    #allocation6 [shape = 'u8[524288]{0}', space=vmem, size = 0x80000, scoped, tag = 'input window, operand 7, single buffered']
    %16 = vsyncpa [#allocation3], 0
    %17 = vsyncpa [#allocation5], 0
    // Predicated region
    $region2: #{dqn_forward.1} parent=1 // pred_check
      _
    $region3: #{dqn_forward.1} parent=1 // pred_check_branch
      %19 = sbr.rel (0) target = $region5
    $region4: #{dqn_forward.1} parent=1 // pred_region
      _
    $region5: #{dqn_forward.1} parent=1 // pred_fallthru
      _
    // Predicated region
    $region6: #{dqn_forward.1} parent=1 // pred_check
      _
    $region7: #{dqn_forward.1} parent=1 // pred_check_branch
      %21 = sbr.rel (0) target = $region9
    $region8: #{dqn_forward.1} parent=1 // pred_region
      _
    $region9: #{dqn_forward.1} parent=1 // pred_fallthru
      _
    // Predicated region
    $region10: #{dqn_forward.1} parent=1 // pred_check
      _
    $region11: #{dqn_forward.1} parent=1 // pred_check_branch
      %23 = sbr.rel (0) target = $region13
    $region12: #{dqn_forward.1} parent=1 // pred_region
      _
    $region13: #{dqn_forward.1} parent=1 // pred_fallthru
      _
    // Predicated region
    $region14: #{dqn_forward.1} parent=1 // pred_check
      _
    $region15: #{dqn_forward.1} parent=1 // pred_check_branch
      %25 = sbr.rel (0) target = $region17
    $region16: #{dqn_forward.1} parent=1 // pred_region
      %27 = vsyncadd [#allocation3], 0
      %s28 = sshll.u32 %s3, 4
      %s29 = int_to_ptr.hbm [resolvable:$true] %s28
      %s30 = sshll.u32 [#allocation2], 4
      %s31 = int_to_ptr.vmem [resolvable:$true] %s30
      %36 = dma.hbm_to_vmem [thread:$0]  %s29, 16384, %s31, [#allocation3], 256, 256, 16
    $region17: #{dqn_forward.1} parent=1 // pred_fallthru
      _
    // Predicated region
    $region18: #{dqn_forward.1} parent=1 // pred_check
      _
    $region19: #{dqn_forward.1} parent=1 // pred_check_branch
      %38 = sbr.rel (0) target = $region21
    $region20: #{dqn_forward.1} parent=1 // pred_region
      _
    $region21: #{dqn_forward.1} parent=1 // pred_fallthru
      _
    // Predicated region
    $region22: #{dqn_forward.1} parent=1 // pred_check
      _
    $region23: #{dqn_forward.1} parent=1 // pred_check_branch
      %40 = sbr.rel (0) target = $region25
    $region24: #{dqn_forward.1} parent=1 // pred_region
      %42 = vsyncadd [#allocation5], 0
      %s43 = sshll.u32 %s5, 4
      %s44 = int_to_ptr.hbm [resolvable:$true] %s43
      %s45 = sshll.u32 [#allocation4], 4
      %s46 = int_to_ptr.vmem [resolvable:$true] %s45
      %51 = dma.hbm_to_vmem [thread:$0]  %s44, 16384, %s46, [#allocation5], 256, 256, 16
    $region25: #{dqn_forward.1} parent=1 // pred_fallthru
      _
    // Predicated region
    $region26: #{dqn_forward.1} parent=1 // pred_check
      _
    $region27: #{dqn_forward.1} parent=1 // pred_check_branch
      %53 = sbr.rel (0) target = $region29
    $region28: #{dqn_forward.1} parent=1 // pred_region
      _
    $region29: #{dqn_forward.1} parent=1 // pred_fallthru
      _
    // Predicated region
    $region30: #{dqn_forward.1} parent=1 // pred_check
      _
    $region31: #{dqn_forward.1} parent=1 // pred_check_branch
      %55 = sbr.rel (0) target = $region33
    $region32: #{dqn_forward.1} parent=1 // pred_region
      %57 = vsyncadd [#allocation5], 0
      %s58 = sshll.u32 %s7, 4
      %s59 = int_to_ptr.hbm [resolvable:$true] %s58
      %s60 = sshll.u32 [#allocation6], 4
      %s61 = int_to_ptr.vmem [resolvable:$true] %s60
      %66 = dma.hbm_to_vmem [thread:$0]  %s59, 16384, %s61, [#allocation5], 256, 256, 16
    $region33: #{dqn_forward.1} parent=1 // pred_fallthru
      _
    // Predicated region
    $region34: #{dqn_forward.1} parent=1 // pred_check
      _
    $region35: #{dqn_forward.1} parent=1 // pred_check_branch
      %68 = sbr.rel (0) target = $region37
    $region36: #{dqn_forward.1} parent=1 // pred_region
      _
    $region37: #{dqn_forward.1} parent=1 // pred_fallthru
      _
    // Predicated region
    $region38: #{dqn_forward.1} parent=1 // pred_check
      _
    $region39: #{dqn_forward.1} parent=1 // pred_check_branch
      %70 = sbr.rel (0) target = $region41
    $region40: #{dqn_forward.1} parent=1 // pred_region
      _
    $region41: #{dqn_forward.1} parent=1 // pred_fallthru
      _
    // Predicated region
    $region42: #{dqn_forward.1} parent=1 // pred_check
      _
    $region43: #{dqn_forward.1} parent=1 // pred_check_branch
      %72 = sbr.rel (0) target = $region45
    $region44: #{dqn_forward.1} parent=1 // pred_region
      _
    $region45: #{dqn_forward.1} parent=1 // pred_fallthru
      _
    // Predicated region
    $region46: #{dqn_forward.1} parent=1 // pred_check
      _
    $region47: #{dqn_forward.1} parent=1 // pred_check_branch
      %74 = sbr.rel (0) target = $region49
    $region48: #{dqn_forward.1} parent=1 // pred_region
      %76 = dma.done [#allocation3], 16384
    $region49: #{dqn_forward.1} parent=1 // pred_fallthru
      _
    // Predicated region
    $region50: #{dqn_forward.1} parent=1 // pred_check
      _
    $region51: #{dqn_forward.1} parent=1 // pred_check_branch
      %78 = sbr.rel (0) target = $region53
    $region52: #{dqn_forward.1} parent=1 // pred_region
      %80 = dma.done [#allocation5], 16384
    $region53: #{dqn_forward.1} parent=1 // pred_fallthru
      _
    // Predicated region
    $region54: #{dqn_forward.1} parent=1 // pred_check
      _
    $region55: #{dqn_forward.1} parent=1 // pred_check_branch
      %82 = sbr.rel (0) target = $region57
    $region56: #{dqn_forward.1} parent=1 // pred_region
      %84 = dma.done [#allocation5], 16384
    $region57: #{dqn_forward.1} parent=1 // pred_fallthru
      _
    %v86 = vld [vmem:[%s0] sm:$0xf]
    %v87 = vld [vmem:[%s0 + $0x4] sm:$0xf]
    %v88 = vld [vmem:[%s1] sm:$0xff]
    %v89 = vld [vmem:[%s1 + $0x8] sm:$0xff]
    %v90 = vld [vmem:[%s1 + $0x10] sm:$0xff]
    %v91 = vld [vmem:[%s1 + $0x18] sm:$0xff]
    %v92 = vld [vmem:[%s2] sm:$0xf]
    %v94 = vperm.slane %v92, 0
    %v95 = vperm.slane %v92, 1
    %v96 = vperm.slane %v92, 2
    %v97 = vperm.slane %v92, 3
    %v104 = vunpack.c.l.b16 %v86
    %v105 = vunpack.c.l.b16 %v87
    %v106 = vpack.c.b16 %v105, %v104
    %v111 = vunpack.c.l.b16 %v88
    %v112 = vunpack.c.h.b16 %v88
    %v113 = vunpack.c.l.b16 %v89
    %v114 = vunpack.c.h.b16 %v89
    %v115 = vunpack.c.l.b16 %v90
    %v116 = vunpack.c.h.b16 %v90
    %v117 = vunpack.c.l.b16 %v91
    %v118 = vunpack.c.h.b16 %v91
    %v119 = vpack.c.b16 %v115, %v111
    %v120 = vpack.c.b16 %v116, %v112
    %v121 = vpack.c.b16 %v117, %v113
    %v122 = vpack.c.b16 %v118, %v114
    %vm127 = vcmask 130048
    %v129 = vsel %vm127, %v106, 0
    %131 = vmatpush.bf16.msra.mxu0 0
    %132 = vmatpush.bf16.msra.mxu0 0
    %133 = vmatpush.bf16.msra.mxu0 0
    %134 = vmatpush.bf16.msra.mxu0 0
    %135 = vmatpush.bf16.msra.mxu0 0
    %136 = vmatpush.bf16.msra.mxu0 0
    %137 = vmatpush.bf16.msra.mxu0 0
    %138 = vmatpush.bf16.msra.mxu0 %v119
    %139 = vmatmul.bf16.gmra.mxu0 %v129
    %v140 = vpop.f32.mrf.mxu0
    %v141 = vadd.f32 %v94, %v140
    %v142 = vpop.f32.mrf.mxu0
    %v143 = vadd.f32 %v94, %v142
    %144 = vdwg.mxu0
    %145 = vmatpush.bf16.msra.mxu0 0
    %146 = vmatpush.bf16.msra.mxu0 0
    %147 = vmatpush.bf16.msra.mxu0 0
    %148 = vmatpush.bf16.msra.mxu0 0
    %149 = vmatpush.bf16.msra.mxu0 0
    %150 = vmatpush.bf16.msra.mxu0 0
    %151 = vmatpush.bf16.msra.mxu0 0
    %152 = vmatpush.bf16.msra.mxu0 %v120
    %153 = vmatmul.bf16.gmra.mxu0 %v129
    %v154 = vpop.f32.mrf.mxu0
    %v155 = vadd.f32 %v95, %v154
    %v156 = vpop.f32.mrf.mxu0
    %v157 = vadd.f32 %v95, %v156
    %158 = vdwg.mxu0
    %159 = vmatpush.bf16.msra.mxu0 0
    %160 = vmatpush.bf16.msra.mxu0 0
    %161 = vmatpush.bf16.msra.mxu0 0
    %162 = vmatpush.bf16.msra.mxu0 0
    %163 = vmatpush.bf16.msra.mxu0 0
    %164 = vmatpush.bf16.msra.mxu0 0
    %165 = vmatpush.bf16.msra.mxu0 0
    %166 = vmatpush.bf16.msra.mxu0 %v121
    %167 = vmatmul.bf16.gmra.mxu0 %v129
    %v168 = vpop.f32.mrf.mxu0
    %v169 = vadd.f32 %v96, %v168
    %v170 = vpop.f32.mrf.mxu0
    %v171 = vadd.f32 %v96, %v170
    %172 = vdwg.mxu0
    %173 = vmatpush.bf16.msra.mxu0 0
    %174 = vmatpush.bf16.msra.mxu0 0
    %175 = vmatpush.bf16.msra.mxu0 0
    %176 = vmatpush.bf16.msra.mxu0 0
    %177 = vmatpush.bf16.msra.mxu0 0
    %178 = vmatpush.bf16.msra.mxu0 0
    %179 = vmatpush.bf16.msra.mxu0 0
    %180 = vmatpush.bf16.msra.mxu0 %v122
    %181 = vmatmul.bf16.gmra.mxu0 %v129
    %v182 = vpop.f32.mrf.mxu0
    %v183 = vadd.f32 %v97, %v182
    %v184 = vpop.f32.mrf.mxu0
    %v185 = vadd.f32 %v97, %v184
    %186 = vdwg.mxu0
    %v187 = vmax.f32 %v141, 0.0
    %v188 = vmax.f32 %v155, 0.0
    %v189 = vmax.f32 %v169, 0.0
    %v190 = vmax.f32 %v183, 0.0
    %v191 = vmax.f32 %v143, 0.0
    %v192 = vmax.f32 %v157, 0.0
    %v193 = vmax.f32 %v171, 0.0
    %v194 = vmax.f32 %v185, 0.0
    %v195 = vpack.c.bf16 %v191, %v187
    %v196 = vpack.c.bf16 %v192, %v188
    %v197 = vpack.c.bf16 %v193, %v189
    %v198 = vpack.c.bf16 %v194, %v190
    %v199 = vld [vmem:[#allocation2] sm:$0xff]
    %v200 = vld [vmem:[#allocation2 + $0x8] sm:$0xff]
    %v201 = vld [vmem:[#allocation2 + $0x10] sm:$0xff]
    %v202 = vld [vmem:[#allocation2 + $0x18] sm:$0xff]
    %v203 = vld [vmem:[#allocation2 + $0x20] sm:$0xff]
    %v204 = vld [vmem:[#allocation2 + $0x28] sm:$0xff]
    %v205 = vld [vmem:[#allocation2 + $0x30] sm:$0xff]
    %v206 = vld [vmem:[#allocation2 + $0x38] sm:$0xff]
    %v207 = vld [vmem:[#allocation2 + $0x40] sm:$0xff]
    %v208 = vld [vmem:[#allocation2 + $0x48] sm:$0xff]
    %v209 = vld [vmem:[#allocation2 + $0x50] sm:$0xff]
    %v210 = vld [vmem:[#allocation2 + $0x58] sm:$0xff]
    %v211 = vld [vmem:[#allocation2 + $0x60] sm:$0xff]
    %v212 = vld [vmem:[#allocation2 + $0x68] sm:$0xff]
    %v213 = vld [vmem:[#allocation2 + $0x70] sm:$0xff]
    %v214 = vld [vmem:[#allocation2 + $0x78] sm:$0xff]
    %v215 = vld [vmem:[#allocation2 + $0x80] sm:$0xff]
    %v216 = vld [vmem:[#allocation2 + $0x88] sm:$0xff]
    %v217 = vld [vmem:[#allocation2 + $0x90] sm:$0xff]
    %v218 = vld [vmem:[#allocation2 + $0x98] sm:$0xff]
    %v219 = vld [vmem:[#allocation2 + $0xa0] sm:$0xff]
    %v220 = vld [vmem:[#allocation2 + $0xa8] sm:$0xff]
    %v221 = vld [vmem:[#allocation2 + $0xb0] sm:$0xff]
    %v222 = vld [vmem:[#allocation2 + $0xb8] sm:$0xff]
    %v223 = vld [vmem:[#allocation2 + $0xc0] sm:$0xff]
    %v224 = vld [vmem:[#allocation2 + $0xc8] sm:$0xff]
    %v225 = vld [vmem:[#allocation2 + $0xd0] sm:$0xff]
    %v226 = vld [vmem:[#allocation2 + $0xd8] sm:$0xff]
    %v227 = vld [vmem:[#allocation2 + $0xe0] sm:$0xff]
    %v228 = vld [vmem:[#allocation2 + $0xe8] sm:$0xff]
    %v229 = vld [vmem:[#allocation2 + $0xf0] sm:$0xff]
    %v230 = vld [vmem:[#allocation2 + $0xf8] sm:$0xff]
    %v231 = vld [vmem:[#allocation2 + $0x100] sm:$0xff]
    %v232 = vld [vmem:[#allocation2 + $0x108] sm:$0xff]
    %v233 = vld [vmem:[#allocation2 + $0x110] sm:$0xff]
    %v234 = vld [vmem:[#allocation2 + $0x118] sm:$0xff]
    %v235 = vld [vmem:[#allocation2 + $0x120] sm:$0xff]
    %v236 = vld [vmem:[#allocation2 + $0x128] sm:$0xff]
    %v237 = vld [vmem:[#allocation2 + $0x130] sm:$0xff]
    %v238 = vld [vmem:[#allocation2 + $0x138] sm:$0xff]
    %v239 = vld [vmem:[#allocation2 + $0x140] sm:$0xff]
    %v240 = vld [vmem:[#allocation2 + $0x148] sm:$0xff]
    %v241 = vld [vmem:[#allocation2 + $0x150] sm:$0xff]
    %v242 = vld [vmem:[#allocation2 + $0x158] sm:$0xff]
    %v243 = vld [vmem:[#allocation2 + $0x160] sm:$0xff]
    %v244 = vld [vmem:[#allocation2 + $0x168] sm:$0xff]
    %v245 = vld [vmem:[#allocation2 + $0x170] sm:$0xff]
    %v246 = vld [vmem:[#allocation2 + $0x178] sm:$0xff]
    %v247 = vld [vmem:[#allocation2 + $0x180] sm:$0xff]
    %v248 = vld [vmem:[#allocation2 + $0x188] sm:$0xff]
    %v249 = vld [vmem:[#allocation2 + $0x190] sm:$0xff]
    %v250 = vld [vmem:[#allocation2 + $0x198] sm:$0xff]
    %v251 = vld [vmem:[#allocation2 + $0x1a0] sm:$0xff]
    %v252 = vld [vmem:[#allocation2 + $0x1a8] sm:$0xff]
    %v253 = vld [vmem:[#allocation2 + $0x1b0] sm:$0xff]
    %v254 = vld [vmem:[#allocation2 + $0x1b8] sm:$0xff]
    %v255 = vld [vmem:[#allocation2 + $0x1c0] sm:$0xff]
    %v256 = vld [vmem:[#allocation2 + $0x1c8] sm:$0xff]
    %v257 = vld [vmem:[#allocation2 + $0x1d0] sm:$0xff]
    %v258 = vld [vmem:[#allocation2 + $0x1d8] sm:$0xff]
    %v259 = vld [vmem:[#allocation2 + $0x1e0] sm:$0xff]
    %v260 = vld [vmem:[#allocation2 + $0x1e8] sm:$0xff]
    %v261 = vld [vmem:[#allocation2 + $0x1f0] sm:$0xff]
    %v262 = vld [vmem:[#allocation2 + $0x1f8] sm:$0xff]
    %v263 = vld [vmem:[#allocation2 + $0x200] sm:$0xff]
    %v264 = vld [vmem:[#allocation2 + $0x208] sm:$0xff]
    %v265 = vld [vmem:[#allocation2 + $0x210] sm:$0xff]
    %v266 = vld [vmem:[#allocation2 + $0x218] sm:$0xff]
    %v267 = vld [vmem:[#allocation2 + $0x220] sm:$0xff]
    %v268 = vld [vmem:[#allocation2 + $0x228] sm:$0xff]
    %v269 = vld [vmem:[#allocation2 + $0x230] sm:$0xff]
    %v270 = vld [vmem:[#allocation2 + $0x238] sm:$0xff]
    %v271 = vld [vmem:[#allocation2 + $0x240] sm:$0xff]
    %v272 = vld [vmem:[#allocation2 + $0x248] sm:$0xff]
    %v273 = vld [vmem:[#allocation2 + $0x250] sm:$0xff]
    %v274 = vld [vmem:[#allocation2 + $0x258] sm:$0xff]
    %v275 = vld [vmem:[#allocation2 + $0x260] sm:$0xff]
    %v276 = vld [vmem:[#allocation2 + $0x268] sm:$0xff]
    %v277 = vld [vmem:[#allocation2 + $0x270] sm:$0xff]
    %v278 = vld [vmem:[#allocation2 + $0x278] sm:$0xff]
    %v279 = vld [vmem:[#allocation2 + $0x280] sm:$0xff]
    %v280 = vld [vmem:[#allocation2 + $0x288] sm:$0xff]
    %v281 = vld [vmem:[#allocation2 + $0x290] sm:$0xff]
    %v282 = vld [vmem:[#allocation2 + $0x298] sm:$0xff]
    %v283 = vld [vmem:[#allocation2 + $0x2a0] sm:$0xff]
    %v284 = vld [vmem:[#allocation2 + $0x2a8] sm:$0xff]
    %v285 = vld [vmem:[#allocation2 + $0x2b0] sm:$0xff]
    %v286 = vld [vmem:[#allocation2 + $0x2b8] sm:$0xff]
    %v287 = vld [vmem:[#allocation2 + $0x2c0] sm:$0xff]
    %v288 = vld [vmem:[#allocation2 + $0x2c8] sm:$0xff]
    %v289 = vld [vmem:[#allocation2 + $0x2d0] sm:$0xff]
    %v290 = vld [vmem:[#allocation2 + $0x2d8] sm:$0xff]
    %v291 = vld [vmem:[#allocation2 + $0x2e0] sm:$0xff]
    %v292 = vld [vmem:[#allocation2 + $0x2e8] sm:$0xff]
    %v293 = vld [vmem:[#allocation2 + $0x2f0] sm:$0xff]
    %v294 = vld [vmem:[#allocation2 + $0x2f8] sm:$0xff]
    %v295 = vld [vmem:[#allocation2 + $0x300] sm:$0xff]
    %v296 = vld [vmem:[#allocation2 + $0x308] sm:$0xff]
    %v297 = vld [vmem:[#allocation2 + $0x310] sm:$0xff]
    %v298 = vld [vmem:[#allocation2 + $0x318] sm:$0xff]
    %v299 = vld [vmem:[#allocation2 + $0x320] sm:$0xff]
    %v300 = vld [vmem:[#allocation2 + $0x328] sm:$0xff]
    %v301 = vld [vmem:[#allocation2 + $0x330] sm:$0xff]
    %v302 = vld [vmem:[#allocation2 + $0x338] sm:$0xff]
    %v303 = vld [vmem:[#allocation2 + $0x340] sm:$0xff]
    %v304 = vld [vmem:[#allocation2 + $0x348] sm:$0xff]
    %v305 = vld [vmem:[#allocation2 + $0x350] sm:$0xff]
    %v306 = vld [vmem:[#allocation2 + $0x358] sm:$0xff]
    %v307 = vld [vmem:[#allocation2 + $0x360] sm:$0xff]
    %v308 = vld [vmem:[#allocation2 + $0x368] sm:$0xff]
    %v309 = vld [vmem:[#allocation2 + $0x370] sm:$0xff]
    %v310 = vld [vmem:[#allocation2 + $0x378] sm:$0xff]
    %v311 = vld [vmem:[#allocation2 + $0x380] sm:$0xff]
    %v312 = vld [vmem:[#allocation2 + $0x388] sm:$0xff]
    %v313 = vld [vmem:[#allocation2 + $0x390] sm:$0xff]
    %v314 = vld [vmem:[#allocation2 + $0x398] sm:$0xff]
    %v315 = vld [vmem:[#allocation2 + $0x3a0] sm:$0xff]
    %v316 = vld [vmem:[#allocation2 + $0x3a8] sm:$0xff]
    %v317 = vld [vmem:[#allocation2 + $0x3b0] sm:$0xff]
    %v318 = vld [vmem:[#allocation2 + $0x3b8] sm:$0xff]
    %v319 = vld [vmem:[#allocation2 + $0x3c0] sm:$0xff]
    %v320 = vld [vmem:[#allocation2 + $0x3c8] sm:$0xff]
    %v321 = vld [vmem:[#allocation2 + $0x3d0] sm:$0xff]
    %v322 = vld [vmem:[#allocation2 + $0x3d8] sm:$0xff]
    %v323 = vld [vmem:[#allocation2 + $0x3e0] sm:$0xff]
    %v324 = vld [vmem:[#allocation2 + $0x3e8] sm:$0xff]
    %v325 = vld [vmem:[#allocation2 + $0x3f0] sm:$0xff]
    %v326 = vld [vmem:[#allocation2 + $0x3f8] sm:$0xff]
    %v327 = vld [vmem:[%s4] sm:$0xf]
    %v329 = vperm.slane %v327, 0
    %v330 = vperm.slane %v327, 1
    %v331 = vperm.slane %v327, 2
    %v332 = vperm.slane %v327, 3
    %v465 = vunpack.c.l.b16 %v199
    %v466 = vunpack.c.h.b16 %v199
    %v467 = vunpack.c.l.b16 %v200
    %v468 = vunpack.c.h.b16 %v200
    %v469 = vunpack.c.l.b16 %v201
    %v470 = vunpack.c.h.b16 %v201
    %v471 = vunpack.c.l.b16 %v202
    %v472 = vunpack.c.h.b16 %v202
    %v473 = vunpack.c.l.b16 %v203
    %v474 = vunpack.c.h.b16 %v203
    %v475 = vunpack.c.l.b16 %v204
    %v476 = vunpack.c.h.b16 %v204
    %v477 = vunpack.c.l.b16 %v205
    %v478 = vunpack.c.h.b16 %v205
    %v479 = vunpack.c.l.b16 %v206
    %v480 = vunpack.c.h.b16 %v206
    %v481 = vunpack.c.l.b16 %v207
    %v482 = vunpack.c.h.b16 %v207
    %v483 = vunpack.c.l.b16 %v208
    %v484 = vunpack.c.h.b16 %v208
    %v485 = vunpack.c.l.b16 %v209
    %v486 = vunpack.c.h.b16 %v209
    %v487 = vunpack.c.l.b16 %v210
    %v488 = vunpack.c.h.b16 %v210
    %v489 = vunpack.c.l.b16 %v211
    %v490 = vunpack.c.h.b16 %v211
    %v491 = vunpack.c.l.b16 %v212
    %v492 = vunpack.c.h.b16 %v212
    %v493 = vunpack.c.l.b16 %v213
    %v494 = vunpack.c.h.b16 %v213
    %v495 = vunpack.c.l.b16 %v214
    %v496 = vunpack.c.h.b16 %v214
    %v497 = vunpack.c.l.b16 %v215
    %v498 = vunpack.c.h.b16 %v215
    %v499 = vunpack.c.l.b16 %v216
    %v500 = vunpack.c.h.b16 %v216
    %v501 = vunpack.c.l.b16 %v217
    %v502 = vunpack.c.h.b16 %v217
    %v503 = vunpack.c.l.b16 %v218
    %v504 = vunpack.c.h.b16 %v218
    %v505 = vunpack.c.l.b16 %v219
    %v506 = vunpack.c.h.b16 %v219
    %v507 = vunpack.c.l.b16 %v220
    %v508 = vunpack.c.h.b16 %v220
    %v509 = vunpack.c.l.b16 %v221
    %v510 = vunpack.c.h.b16 %v221
    %v511 = vunpack.c.l.b16 %v222
    %v512 = vunpack.c.h.b16 %v222
    %v513 = vunpack.c.l.b16 %v223
    %v514 = vunpack.c.h.b16 %v223
    %v515 = vunpack.c.l.b16 %v224
    %v516 = vunpack.c.h.b16 %v224
    %v517 = vunpack.c.l.b16 %v225
    %v518 = vunpack.c.h.b16 %v225
    %v519 = vunpack.c.l.b16 %v226
    %v520 = vunpack.c.h.b16 %v226
    %v521 = vunpack.c.l.b16 %v227
    %v522 = vunpack.c.h.b16 %v227
    %v523 = vunpack.c.l.b16 %v228
    %v524 = vunpack.c.h.b16 %v228
    %v525 = vunpack.c.l.b16 %v229
    %v526 = vunpack.c.h.b16 %v229
    %v527 = vunpack.c.l.b16 %v230
    %v528 = vunpack.c.h.b16 %v230
    %v529 = vunpack.c.l.b16 %v231
    %v530 = vunpack.c.h.b16 %v231
    %v531 = vunpack.c.l.b16 %v232
    %v532 = vunpack.c.h.b16 %v232
    %v533 = vunpack.c.l.b16 %v233
    %v534 = vunpack.c.h.b16 %v233
    %v535 = vunpack.c.l.b16 %v234
    %v536 = vunpack.c.h.b16 %v234
    %v537 = vunpack.c.l.b16 %v235
    %v538 = vunpack.c.h.b16 %v235
    %v539 = vunpack.c.l.b16 %v236
    %v540 = vunpack.c.h.b16 %v236
    %v541 = vunpack.c.l.b16 %v237
    %v542 = vunpack.c.h.b16 %v237
    %v543 = vunpack.c.l.b16 %v238
    %v544 = vunpack.c.h.b16 %v238
    %v545 = vunpack.c.l.b16 %v239
    %v546 = vunpack.c.h.b16 %v239
    %v547 = vunpack.c.l.b16 %v240
    %v548 = vunpack.c.h.b16 %v240
    %v549 = vunpack.c.l.b16 %v241
    %v550 = vunpack.c.h.b16 %v241
    %v551 = vunpack.c.l.b16 %v242
    %v552 = vunpack.c.h.b16 %v242
    %v553 = vunpack.c.l.b16 %v243
    %v554 = vunpack.c.h.b16 %v243
    %v555 = vunpack.c.l.b16 %v244
    %v556 = vunpack.c.h.b16 %v244
    %v557 = vunpack.c.l.b16 %v245
    %v558 = vunpack.c.h.b16 %v245
    %v559 = vunpack.c.l.b16 %v246
    %v560 = vunpack.c.h.b16 %v246
    %v561 = vunpack.c.l.b16 %v247
    %v562 = vunpack.c.h.b16 %v247
    %v563 = vunpack.c.l.b16 %v248
    %v564 = vunpack.c.h.b16 %v248
    %v565 = vunpack.c.l.b16 %v249
    %v566 = vunpack.c.h.b16 %v249
    %v567 = vunpack.c.l.b16 %v250
    %v568 = vunpack.c.h.b16 %v250
    %v569 = vunpack.c.l.b16 %v251
    %v570 = vunpack.c.h.b16 %v251
    %v571 = vunpack.c.l.b16 %v252
    %v572 = vunpack.c.h.b16 %v252
    %v573 = vunpack.c.l.b16 %v253
    %v574 = vunpack.c.h.b16 %v253
    %v575 = vunpack.c.l.b16 %v254
    %v576 = vunpack.c.h.b16 %v254
    %v577 = vunpack.c.l.b16 %v255
    %v578 = vunpack.c.h.b16 %v255
    %v579 = vunpack.c.l.b16 %v256
    %v580 = vunpack.c.h.b16 %v256
    %v581 = vunpack.c.l.b16 %v257
    %v582 = vunpack.c.h.b16 %v257
    %v583 = vunpack.c.l.b16 %v258
    %v584 = vunpack.c.h.b16 %v258
    %v585 = vunpack.c.l.b16 %v259
    %v586 = vunpack.c.h.b16 %v259
    %v587 = vunpack.c.l.b16 %v260
    %v588 = vunpack.c.h.b16 %v260
    %v589 = vunpack.c.l.b16 %v261
    %v590 = vunpack.c.h.b16 %v261
    %v591 = vunpack.c.l.b16 %v262
    %v592 = vunpack.c.h.b16 %v262
    %v593 = vunpack.c.l.b16 %v263
    %v594 = vunpack.c.h.b16 %v263
    %v595 = vunpack.c.l.b16 %v264
    %v596 = vunpack.c.h.b16 %v264
    %v597 = vunpack.c.l.b16 %v265
    %v598 = vunpack.c.h.b16 %v265
    %v599 = vunpack.c.l.b16 %v266
    %v600 = vunpack.c.h.b16 %v266
    %v601 = vunpack.c.l.b16 %v267
    %v602 = vunpack.c.h.b16 %v267
    %v603 = vunpack.c.l.b16 %v268
    %v604 = vunpack.c.h.b16 %v268
    %v605 = vunpack.c.l.b16 %v269
    %v606 = vunpack.c.h.b16 %v269
    %v607 = vunpack.c.l.b16 %v270
    %v608 = vunpack.c.h.b16 %v270
    %v609 = vunpack.c.l.b16 %v271
    %v610 = vunpack.c.h.b16 %v271
    %v611 = vunpack.c.l.b16 %v272
    %v612 = vunpack.c.h.b16 %v272
    %v613 = vunpack.c.l.b16 %v273
    %v614 = vunpack.c.h.b16 %v273
    %v615 = vunpack.c.l.b16 %v274
    %v616 = vunpack.c.h.b16 %v274
    %v617 = vunpack.c.l.b16 %v275
    %v618 = vunpack.c.h.b16 %v275
    %v619 = vunpack.c.l.b16 %v276
    %v620 = vunpack.c.h.b16 %v276
    %v621 = vunpack.c.l.b16 %v277
    %v622 = vunpack.c.h.b16 %v277
    %v623 = vunpack.c.l.b16 %v278
    %v624 = vunpack.c.h.b16 %v278
    %v625 = vunpack.c.l.b16 %v279
    %v626 = vunpack.c.h.b16 %v279
    %v627 = vunpack.c.l.b16 %v280
    %v628 = vunpack.c.h.b16 %v280
    %v629 = vunpack.c.l.b16 %v281
    %v630 = vunpack.c.h.b16 %v281
    %v631 = vunpack.c.l.b16 %v282
    %v632 = vunpack.c.h.b16 %v282
    %v633 = vunpack.c.l.b16 %v283
    %v634 = vunpack.c.h.b16 %v283
    %v635 = vunpack.c.l.b16 %v284
    %v636 = vunpack.c.h.b16 %v284
    %v637 = vunpack.c.l.b16 %v285
    %v638 = vunpack.c.h.b16 %v285
    %v639 = vunpack.c.l.b16 %v286
    %v640 = vunpack.c.h.b16 %v286
    %v641 = vunpack.c.l.b16 %v287
    %v642 = vunpack.c.h.b16 %v287
    %v643 = vunpack.c.l.b16 %v288
    %v644 = vunpack.c.h.b16 %v288
    %v645 = vunpack.c.l.b16 %v289
    %v646 = vunpack.c.h.b16 %v289
    %v647 = vunpack.c.l.b16 %v290
    %v648 = vunpack.c.h.b16 %v290
    %v649 = vunpack.c.l.b16 %v291
    %v650 = vunpack.c.h.b16 %v291
    %v651 = vunpack.c.l.b16 %v292
    %v652 = vunpack.c.h.b16 %v292
    %v653 = vunpack.c.l.b16 %v293
    %v654 = vunpack.c.h.b16 %v293
    %v655 = vunpack.c.l.b16 %v294
    %v656 = vunpack.c.h.b16 %v294
    %v657 = vunpack.c.l.b16 %v295
    %v658 = vunpack.c.h.b16 %v295
    %v659 = vunpack.c.l.b16 %v296
    %v660 = vunpack.c.h.b16 %v296
    %v661 = vunpack.c.l.b16 %v297
    %v662 = vunpack.c.h.b16 %v297
    %v663 = vunpack.c.l.b16 %v298
    %v664 = vunpack.c.h.b16 %v298
    %v665 = vunpack.c.l.b16 %v299
    %v666 = vunpack.c.h.b16 %v299
    %v667 = vunpack.c.l.b16 %v300
    %v668 = vunpack.c.h.b16 %v300
    %v669 = vunpack.c.l.b16 %v301
    %v670 = vunpack.c.h.b16 %v301
    %v671 = vunpack.c.l.b16 %v302
    %v672 = vunpack.c.h.b16 %v302
    %v673 = vunpack.c.l.b16 %v303
    %v674 = vunpack.c.h.b16 %v303
    %v675 = vunpack.c.l.b16 %v304
    %v676 = vunpack.c.h.b16 %v304
    %v677 = vunpack.c.l.b16 %v305
    %v678 = vunpack.c.h.b16 %v305
    %v679 = vunpack.c.l.b16 %v306
    %v680 = vunpack.c.h.b16 %v306
    %v681 = vunpack.c.l.b16 %v307
    %v682 = vunpack.c.h.b16 %v307
    %v683 = vunpack.c.l.b16 %v308
    %v684 = vunpack.c.h.b16 %v308
    %v685 = vunpack.c.l.b16 %v309
    %v686 = vunpack.c.h.b16 %v309
    %v687 = vunpack.c.l.b16 %v310
    %v688 = vunpack.c.h.b16 %v310
    %v689 = vunpack.c.l.b16 %v311
    %v690 = vunpack.c.h.b16 %v311
    %v691 = vunpack.c.l.b16 %v312
    %v692 = vunpack.c.h.b16 %v312
    %v693 = vunpack.c.l.b16 %v313
    %v694 = vunpack.c.h.b16 %v313
    %v695 = vunpack.c.l.b16 %v314
    %v696 = vunpack.c.h.b16 %v314
    %v697 = vunpack.c.l.b16 %v315
    %v698 = vunpack.c.h.b16 %v315
    %v699 = vunpack.c.l.b16 %v316
    %v700 = vunpack.c.h.b16 %v316
    %v701 = vunpack.c.l.b16 %v317
    %v702 = vunpack.c.h.b16 %v317
    %v703 = vunpack.c.l.b16 %v318
    %v704 = vunpack.c.h.b16 %v318
    %v705 = vunpack.c.l.b16 %v319
    %v706 = vunpack.c.h.b16 %v319
    %v707 = vunpack.c.l.b16 %v320
    %v708 = vunpack.c.h.b16 %v320
    %v709 = vunpack.c.l.b16 %v321
    %v710 = vunpack.c.h.b16 %v321
    %v711 = vunpack.c.l.b16 %v322
    %v712 = vunpack.c.h.b16 %v322
    %v713 = vunpack.c.l.b16 %v323
    %v714 = vunpack.c.h.b16 %v323
    %v715 = vunpack.c.l.b16 %v324
    %v716 = vunpack.c.h.b16 %v324
    %v717 = vunpack.c.l.b16 %v325
    %v718 = vunpack.c.h.b16 %v325
    %v719 = vunpack.c.l.b16 %v326
    %v720 = vunpack.c.h.b16 %v326
    %v721 = vpack.c.b16 %v469, %v465
    %v722 = vpack.c.b16 %v470, %v466
    %v723 = vpack.c.b16 %v471, %v467
    %v724 = vpack.c.b16 %v472, %v468
    %v725 = vpack.c.b16 %v477, %v473
    %v726 = vpack.c.b16 %v478, %v474
    %v727 = vpack.c.b16 %v479, %v475
    %v728 = vpack.c.b16 %v480, %v476
    %v729 = vpack.c.b16 %v485, %v481
    %v730 = vpack.c.b16 %v486, %v482
    %v731 = vpack.c.b16 %v487, %v483
    %v732 = vpack.c.b16 %v488, %v484
    %v733 = vpack.c.b16 %v493, %v489
    %v734 = vpack.c.b16 %v494, %v490
    %v735 = vpack.c.b16 %v495, %v491
    %v736 = vpack.c.b16 %v496, %v492
    %v737 = vpack.c.b16 %v501, %v497
    %v738 = vpack.c.b16 %v502, %v498
    %v739 = vpack.c.b16 %v503, %v499
    %v740 = vpack.c.b16 %v504, %v500
    %v741 = vpack.c.b16 %v509, %v505
    %v742 = vpack.c.b16 %v510, %v506
    %v743 = vpack.c.b16 %v511, %v507
    %v744 = vpack.c.b16 %v512, %v508
    %v745 = vpack.c.b16 %v517, %v513
    %v746 = vpack.c.b16 %v518, %v514
    %v747 = vpack.c.b16 %v519, %v515
    %v748 = vpack.c.b16 %v520, %v516
    %v749 = vpack.c.b16 %v525, %v521
    %v750 = vpack.c.b16 %v526, %v522
    %v751 = vpack.c.b16 %v527, %v523
    %v752 = vpack.c.b16 %v528, %v524
    %v753 = vpack.c.b16 %v533, %v529
    %v754 = vpack.c.b16 %v534, %v530
    %v755 = vpack.c.b16 %v535, %v531
    %v756 = vpack.c.b16 %v536, %v532
    %v757 = vpack.c.b16 %v541, %v537
    %v758 = vpack.c.b16 %v542, %v538
    %v759 = vpack.c.b16 %v543, %v539
    %v760 = vpack.c.b16 %v544, %v540
    %v761 = vpack.c.b16 %v549, %v545
    %v762 = vpack.c.b16 %v550, %v546
    %v763 = vpack.c.b16 %v551, %v547
    %v764 = vpack.c.b16 %v552, %v548
    %v765 = vpack.c.b16 %v557, %v553
    %v766 = vpack.c.b16 %v558, %v554
    %v767 = vpack.c.b16 %v559, %v555
    %v768 = vpack.c.b16 %v560, %v556
    %v769 = vpack.c.b16 %v565, %v561
    %v770 = vpack.c.b16 %v566, %v562
    %v771 = vpack.c.b16 %v567, %v563
    %v772 = vpack.c.b16 %v568, %v564
    %v773 = vpack.c.b16 %v573, %v569
    %v774 = vpack.c.b16 %v574, %v570
    %v775 = vpack.c.b16 %v575, %v571
    %v776 = vpack.c.b16 %v576, %v572
    %v777 = vpack.c.b16 %v581, %v577
    %v778 = vpack.c.b16 %v582, %v578
    %v779 = vpack.c.b16 %v583, %v579
    %v780 = vpack.c.b16 %v584, %v580
    %v781 = vpack.c.b16 %v589, %v585
    %v782 = vpack.c.b16 %v590, %v586
    %v783 = vpack.c.b16 %v591, %v587
    %v784 = vpack.c.b16 %v592, %v588
    %v785 = vpack.c.b16 %v597, %v593
    %v786 = vpack.c.b16 %v598, %v594
    %v787 = vpack.c.b16 %v599, %v595
    %v788 = vpack.c.b16 %v600, %v596
    %v789 = vpack.c.b16 %v605, %v601
    %v790 = vpack.c.b16 %v606, %v602
    %v791 = vpack.c.b16 %v607, %v603
    %v792 = vpack.c.b16 %v608, %v604
    %v793 = vpack.c.b16 %v613, %v609
    %v794 = vpack.c.b16 %v614, %v610
    %v795 = vpack.c.b16 %v615, %v611
    %v796 = vpack.c.b16 %v616, %v612
    %v797 = vpack.c.b16 %v621, %v617
    %v798 = vpack.c.b16 %v622, %v618
    %v799 = vpack.c.b16 %v623, %v619
    %v800 = vpack.c.b16 %v624, %v620
    %v801 = vpack.c.b16 %v629, %v625
    %v802 = vpack.c.b16 %v630, %v626
    %v803 = vpack.c.b16 %v631, %v627
    %v804 = vpack.c.b16 %v632, %v628
    %v805 = vpack.c.b16 %v637, %v633
    %v806 = vpack.c.b16 %v638, %v634
    %v807 = vpack.c.b16 %v639, %v635
    %v808 = vpack.c.b16 %v640, %v636
    %v809 = vpack.c.b16 %v645, %v641
    %v810 = vpack.c.b16 %v646, %v642
    %v811 = vpack.c.b16 %v647, %v643
    %v812 = vpack.c.b16 %v648, %v644
    %v813 = vpack.c.b16 %v653, %v649
    %v814 = vpack.c.b16 %v654, %v650
    %v815 = vpack.c.b16 %v655, %v651
    %v816 = vpack.c.b16 %v656, %v652
    %v817 = vpack.c.b16 %v661, %v657
    %v818 = vpack.c.b16 %v662, %v658
    %v819 = vpack.c.b16 %v663, %v659
    %v820 = vpack.c.b16 %v664, %v660
    %v821 = vpack.c.b16 %v669, %v665
    %v822 = vpack.c.b16 %v670, %v666
    %v823 = vpack.c.b16 %v671, %v667
    %v824 = vpack.c.b16 %v672, %v668
    %v825 = vpack.c.b16 %v677, %v673
    %v826 = vpack.c.b16 %v678, %v674
    %v827 = vpack.c.b16 %v679, %v675
    %v828 = vpack.c.b16 %v680, %v676
    %v829 = vpack.c.b16 %v685, %v681
    %v830 = vpack.c.b16 %v686, %v682
    %v831 = vpack.c.b16 %v687, %v683
    %v832 = vpack.c.b16 %v688, %v684
    %v833 = vpack.c.b16 %v693, %v689
    %v834 = vpack.c.b16 %v694, %v690
    %v835 = vpack.c.b16 %v695, %v691
    %v836 = vpack.c.b16 %v696, %v692
    %v837 = vpack.c.b16 %v701, %v697
    %v838 = vpack.c.b16 %v702, %v698
    %v839 = vpack.c.b16 %v703, %v699
    %v840 = vpack.c.b16 %v704, %v700
    %v841 = vpack.c.b16 %v709, %v705
    %v842 = vpack.c.b16 %v710, %v706
    %v843 = vpack.c.b16 %v711, %v707
    %v844 = vpack.c.b16 %v712, %v708
    %v845 = vpack.c.b16 %v717, %v713
    %v846 = vpack.c.b16 %v718, %v714
    %v847 = vpack.c.b16 %v719, %v715
    %v848 = vpack.c.b16 %v720, %v716
    %977 = vmatpush.bf16.msra.mxu0 %v749
    %978 = vmatpush.bf16.msra.mxu0 %v745
    %979 = vmatpush.bf16.msra.mxu0 %v741
    %980 = vmatpush.bf16.msra.mxu0 %v737
    %981 = vmatpush.bf16.msra.mxu0 %v733
    %982 = vmatpush.bf16.msra.mxu0 %v729
    %983 = vmatpush.bf16.msra.mxu0 %v725
    %984 = vmatpush.bf16.msra.mxu0 %v721
    %985 = vmatmul.bf16.gmra.mxu0 %v195
    %v986 = vpop.f32.mrf.mxu0
    %v987 = vadd.f32 %v329, %v986
    %v988 = vpop.f32.mrf.mxu0
    %v989 = vadd.f32 %v329, %v988
    %990 = vdwg.mxu0
    %991 = vmatpush.bf16.msra.mxu0 %v781
    %992 = vmatpush.bf16.msra.mxu0 %v777
    %993 = vmatpush.bf16.msra.mxu0 %v773
    %994 = vmatpush.bf16.msra.mxu0 %v769
    %995 = vmatpush.bf16.msra.mxu0 %v765
    %996 = vmatpush.bf16.msra.mxu0 %v761
    %997 = vmatpush.bf16.msra.mxu0 %v757
    %998 = vmatpush.bf16.msra.mxu0 %v753
    %999 = vmatmul.bf16.gmra.mxu0 %v196
    %v1000 = vpop.f32.mrf.mxu0
    %v1001 = vadd.f32 %v987, %v1000
    %v1002 = vpop.f32.mrf.mxu0
    %v1003 = vadd.f32 %v989, %v1002
    %1004 = vdwg.mxu0
    %1005 = vmatpush.bf16.msra.mxu0 %v813
    %1006 = vmatpush.bf16.msra.mxu0 %v809
    %1007 = vmatpush.bf16.msra.mxu0 %v805
    %1008 = vmatpush.bf16.msra.mxu0 %v801
    %1009 = vmatpush.bf16.msra.mxu0 %v797
    %1010 = vmatpush.bf16.msra.mxu0 %v793
    %1011 = vmatpush.bf16.msra.mxu0 %v789
    %1012 = vmatpush.bf16.msra.mxu0 %v785
    %1013 = vmatmul.bf16.gmra.mxu0 %v197
    %v1014 = vpop.f32.mrf.mxu0
    %v1015 = vadd.f32 %v1001, %v1014
    %v1016 = vpop.f32.mrf.mxu0
    %v1017 = vadd.f32 %v1003, %v1016
    %1018 = vdwg.mxu0
    %1019 = vmatpush.bf16.msra.mxu0 %v845
    %1020 = vmatpush.bf16.msra.mxu0 %v841
    %1021 = vmatpush.bf16.msra.mxu0 %v837
    %1022 = vmatpush.bf16.msra.mxu0 %v833
    %1023 = vmatpush.bf16.msra.mxu0 %v829
    %1024 = vmatpush.bf16.msra.mxu0 %v825
    %1025 = vmatpush.bf16.msra.mxu0 %v821
    %1026 = vmatpush.bf16.msra.mxu0 %v817
    %1027 = vmatmul.bf16.gmra.mxu0 %v198
    %v1028 = vpop.f32.mrf.mxu0
    %v1029 = vadd.f32 %v1015, %v1028
    %v1030 = vpop.f32.mrf.mxu0
    %v1031 = vadd.f32 %v1017, %v1030
    %1032 = vdwg.mxu0
    %1033 = vmatpush.bf16.msra.mxu0 %v750
    %1034 = vmatpush.bf16.msra.mxu0 %v746
    %1035 = vmatpush.bf16.msra.mxu0 %v742
    %1036 = vmatpush.bf16.msra.mxu0 %v738
    %1037 = vmatpush.bf16.msra.mxu0 %v734
    %1038 = vmatpush.bf16.msra.mxu0 %v730
    %1039 = vmatpush.bf16.msra.mxu0 %v726
    %1040 = vmatpush.bf16.msra.mxu0 %v722
    %1041 = vmatmul.bf16.gmra.mxu0 %v195
    %v1042 = vpop.f32.mrf.mxu0
    %v1043 = vadd.f32 %v330, %v1042
    %v1044 = vpop.f32.mrf.mxu0
    %v1045 = vadd.f32 %v330, %v1044
    %1046 = vdwg.mxu0
    %1047 = vmatpush.bf16.msra.mxu0 %v782
    %1048 = vmatpush.bf16.msra.mxu0 %v778
    %1049 = vmatpush.bf16.msra.mxu0 %v774
    %1050 = vmatpush.bf16.msra.mxu0 %v770
    %1051 = vmatpush.bf16.msra.mxu0 %v766
    %1052 = vmatpush.bf16.msra.mxu0 %v762
    %1053 = vmatpush.bf16.msra.mxu0 %v758
    %1054 = vmatpush.bf16.msra.mxu0 %v754
    %1055 = vmatmul.bf16.gmra.mxu0 %v196
    %v1056 = vpop.f32.mrf.mxu0
    %v1057 = vadd.f32 %v1043, %v1056
    %v1058 = vpop.f32.mrf.mxu0
    %v1059 = vadd.f32 %v1045, %v1058
    %1060 = vdwg.mxu0
    %1061 = vmatpush.bf16.msra.mxu0 %v814
    %1062 = vmatpush.bf16.msra.mxu0 %v810
    %1063 = vmatpush.bf16.msra.mxu0 %v806
    %1064 = vmatpush.bf16.msra.mxu0 %v802
    %1065 = vmatpush.bf16.msra.mxu0 %v798
    %1066 = vmatpush.bf16.msra.mxu0 %v794
    %1067 = vmatpush.bf16.msra.mxu0 %v790
    %1068 = vmatpush.bf16.msra.mxu0 %v786
    %1069 = vmatmul.bf16.gmra.mxu0 %v197
    %v1070 = vpop.f32.mrf.mxu0
    %v1071 = vadd.f32 %v1057, %v1070
    %v1072 = vpop.f32.mrf.mxu0
    %v1073 = vadd.f32 %v1059, %v1072
    %1074 = vdwg.mxu0
    %1075 = vmatpush.bf16.msra.mxu0 %v846
    %1076 = vmatpush.bf16.msra.mxu0 %v842
    %1077 = vmatpush.bf16.msra.mxu0 %v838
    %1078 = vmatpush.bf16.msra.mxu0 %v834
    %1079 = vmatpush.bf16.msra.mxu0 %v830
    %1080 = vmatpush.bf16.msra.mxu0 %v826
    %1081 = vmatpush.bf16.msra.mxu0 %v822
    %1082 = vmatpush.bf16.msra.mxu0 %v818
    %1083 = vmatmul.bf16.gmra.mxu0 %v198
    %v1084 = vpop.f32.mrf.mxu0
    %v1085 = vadd.f32 %v1071, %v1084
    %v1086 = vpop.f32.mrf.mxu0
    %v1087 = vadd.f32 %v1073, %v1086
    %1088 = vdwg.mxu0
    %1089 = vmatpush.bf16.msra.mxu0 %v751
    %1090 = vmatpush.bf16.msra.mxu0 %v747
    %1091 = vmatpush.bf16.msra.mxu0 %v743
    %1092 = vmatpush.bf16.msra.mxu0 %v739
    %1093 = vmatpush.bf16.msra.mxu0 %v735
    %1094 = vmatpush.bf16.msra.mxu0 %v731
    %1095 = vmatpush.bf16.msra.mxu0 %v727
    %1096 = vmatpush.bf16.msra.mxu0 %v723
    %1097 = vmatmul.bf16.gmra.mxu0 %v195
    %v1098 = vpop.f32.mrf.mxu0
    %v1099 = vadd.f32 %v331, %v1098
    %v1100 = vpop.f32.mrf.mxu0
    %v1101 = vadd.f32 %v331, %v1100
    %1102 = vdwg.mxu0
    %1103 = vmatpush.bf16.msra.mxu0 %v783
    %1104 = vmatpush.bf16.msra.mxu0 %v779
    %1105 = vmatpush.bf16.msra.mxu0 %v775
    %1106 = vmatpush.bf16.msra.mxu0 %v771
    %1107 = vmatpush.bf16.msra.mxu0 %v767
    %1108 = vmatpush.bf16.msra.mxu0 %v763
    %1109 = vmatpush.bf16.msra.mxu0 %v759
    %1110 = vmatpush.bf16.msra.mxu0 %v755
    %1111 = vmatmul.bf16.gmra.mxu0 %v196
    %v1112 = vpop.f32.mrf.mxu0
    %v1113 = vadd.f32 %v1099, %v1112
    %v1114 = vpop.f32.mrf.mxu0
    %v1115 = vadd.f32 %v1101, %v1114
    %1116 = vdwg.mxu0
    %1117 = vmatpush.bf16.msra.mxu0 %v815
    %1118 = vmatpush.bf16.msra.mxu0 %v811
    %1119 = vmatpush.bf16.msra.mxu0 %v807
    %1120 = vmatpush.bf16.msra.mxu0 %v803
    %1121 = vmatpush.bf16.msra.mxu0 %v799
    %1122 = vmatpush.bf16.msra.mxu0 %v795
    %1123 = vmatpush.bf16.msra.mxu0 %v791
    %1124 = vmatpush.bf16.msra.mxu0 %v787
    %1125 = vmatmul.bf16.gmra.mxu0 %v197
    %v1126 = vpop.f32.mrf.mxu0
    %v1127 = vadd.f32 %v1113, %v1126
    %v1128 = vpop.f32.mrf.mxu0
    %v1129 = vadd.f32 %v1115, %v1128
    %1130 = vdwg.mxu0
    %1131 = vmatpush.bf16.msra.mxu0 %v847
    %1132 = vmatpush.bf16.msra.mxu0 %v843
    %1133 = vmatpush.bf16.msra.mxu0 %v839
    %1134 = vmatpush.bf16.msra.mxu0 %v835
    %1135 = vmatpush.bf16.msra.mxu0 %v831
    %1136 = vmatpush.bf16.msra.mxu0 %v827
    %1137 = vmatpush.bf16.msra.mxu0 %v823
    %1138 = vmatpush.bf16.msra.mxu0 %v819
    %1139 = vmatmul.bf16.gmra.mxu0 %v198
    %v1140 = vpop.f32.mrf.mxu0
    %v1141 = vadd.f32 %v1127, %v1140
    %v1142 = vpop.f32.mrf.mxu0
    %v1143 = vadd.f32 %v1129, %v1142
    %1144 = vdwg.mxu0
    %1145 = vmatpush.bf16.msra.mxu0 %v752
    %1146 = vmatpush.bf16.msra.mxu0 %v748
    %1147 = vmatpush.bf16.msra.mxu0 %v744
    %1148 = vmatpush.bf16.msra.mxu0 %v740
    %1149 = vmatpush.bf16.msra.mxu0 %v736
    %1150 = vmatpush.bf16.msra.mxu0 %v732
    %1151 = vmatpush.bf16.msra.mxu0 %v728
    %1152 = vmatpush.bf16.msra.mxu0 %v724
    %1153 = vmatmul.bf16.gmra.mxu0 %v195
    %v1154 = vpop.f32.mrf.mxu0
    %v1155 = vadd.f32 %v332, %v1154
    %v1156 = vpop.f32.mrf.mxu0
    %v1157 = vadd.f32 %v332, %v1156
    %1158 = vdwg.mxu0
    %1159 = vmatpush.bf16.msra.mxu0 %v784
    %1160 = vmatpush.bf16.msra.mxu0 %v780
    %1161 = vmatpush.bf16.msra.mxu0 %v776
    %1162 = vmatpush.bf16.msra.mxu0 %v772
    %1163 = vmatpush.bf16.msra.mxu0 %v768
    %1164 = vmatpush.bf16.msra.mxu0 %v764
    %1165 = vmatpush.bf16.msra.mxu0 %v760
    %1166 = vmatpush.bf16.msra.mxu0 %v756
    %1167 = vmatmul.bf16.gmra.mxu0 %v196
    %v1168 = vpop.f32.mrf.mxu0
    %v1169 = vadd.f32 %v1155, %v1168
    %v1170 = vpop.f32.mrf.mxu0
    %v1171 = vadd.f32 %v1157, %v1170
    %1172 = vdwg.mxu0
    %1173 = vmatpush.bf16.msra.mxu0 %v816
    %1174 = vmatpush.bf16.msra.mxu0 %v812
    %1175 = vmatpush.bf16.msra.mxu0 %v808
    %1176 = vmatpush.bf16.msra.mxu0 %v804
    %1177 = vmatpush.bf16.msra.mxu0 %v800
    %1178 = vmatpush.bf16.msra.mxu0 %v796
    %1179 = vmatpush.bf16.msra.mxu0 %v792
    %1180 = vmatpush.bf16.msra.mxu0 %v788
    %1181 = vmatmul.bf16.gmra.mxu0 %v197
    %v1182 = vpop.f32.mrf.mxu0
    %v1183 = vadd.f32 %v1169, %v1182
    %v1184 = vpop.f32.mrf.mxu0
    %v1185 = vadd.f32 %v1171, %v1184
    %1186 = vdwg.mxu0
    %1187 = vmatpush.bf16.msra.mxu0 %v848
    %1188 = vmatpush.bf16.msra.mxu0 %v844
    %1189 = vmatpush.bf16.msra.mxu0 %v840
    %1190 = vmatpush.bf16.msra.mxu0 %v836
    %1191 = vmatpush.bf16.msra.mxu0 %v832
    %1192 = vmatpush.bf16.msra.mxu0 %v828
    %1193 = vmatpush.bf16.msra.mxu0 %v824
    %1194 = vmatpush.bf16.msra.mxu0 %v820
    %1195 = vmatmul.bf16.gmra.mxu0 %v198
    %v1196 = vpop.f32.mrf.mxu0
    %v1197 = vadd.f32 %v1183, %v1196
    %v1198 = vpop.f32.mrf.mxu0
    %v1199 = vadd.f32 %v1185, %v1198
    %1200 = vdwg.mxu0
    %v1201 = vmax.f32 %v1029, 0.0
    %v1202 = vmax.f32 %v1085, 0.0
    %v1203 = vmax.f32 %v1141, 0.0
    %v1204 = vmax.f32 %v1197, 0.0
    %v1205 = vmax.f32 %v1031, 0.0
    %v1206 = vmax.f32 %v1087, 0.0
    %v1207 = vmax.f32 %v1143, 0.0
    %v1208 = vmax.f32 %v1199, 0.0
    %v1209 = vpack.c.bf16 %v1205, %v1201
    %v1210 = vpack.c.bf16 %v1206, %v1202
    %v1211 = vpack.c.bf16 %v1207, %v1203
    %v1212 = vpack.c.bf16 %v1208, %v1204
    %v1213 = vld [vmem:[#allocation4] sm:$0xff]
    %v1214 = vld [vmem:[#allocation4 + $0x8] sm:$0xff]
    %v1215 = vld [vmem:[#allocation4 + $0x10] sm:$0xff]
    %v1216 = vld [vmem:[#allocation4 + $0x18] sm:$0xff]
    %v1217 = vld [vmem:[#allocation4 + $0x20] sm:$0xff]
    %v1218 = vld [vmem:[#allocation4 + $0x28] sm:$0xff]
    %v1219 = vld [vmem:[#allocation4 + $0x30] sm:$0xff]
    %v1220 = vld [vmem:[#allocation4 + $0x38] sm:$0xff]
    %v1221 = vld [vmem:[#allocation4 + $0x40] sm:$0xff]
    %v1222 = vld [vmem:[#allocation4 + $0x48] sm:$0xff]
    %v1223 = vld [vmem:[#allocation4 + $0x50] sm:$0xff]
    %v1224 = vld [vmem:[#allocation4 + $0x58] sm:$0xff]
    %v1225 = vld [vmem:[#allocation4 + $0x60] sm:$0xff]
    %v1226 = vld [vmem:[#allocation4 + $0x68] sm:$0xff]
    %v1227 = vld [vmem:[#allocation4 + $0x70] sm:$0xff]
    %v1228 = vld [vmem:[#allocation4 + $0x78] sm:$0xff]
    %v1229 = vld [vmem:[#allocation4 + $0x80] sm:$0xff]
    %v1230 = vld [vmem:[#allocation4 + $0x88] sm:$0xff]
    %v1231 = vld [vmem:[#allocation4 + $0x90] sm:$0xff]
    %v1232 = vld [vmem:[#allocation4 + $0x98] sm:$0xff]
    %v1233 = vld [vmem:[#allocation4 + $0xa0] sm:$0xff]
    %v1234 = vld [vmem:[#allocation4 + $0xa8] sm:$0xff]
    %v1235 = vld [vmem:[#allocation4 + $0xb0] sm:$0xff]
    %v1236 = vld [vmem:[#allocation4 + $0xb8] sm:$0xff]
    %v1237 = vld [vmem:[#allocation4 + $0xc0] sm:$0xff]
    %v1238 = vld [vmem:[#allocation4 + $0xc8] sm:$0xff]
    %v1239 = vld [vmem:[#allocation4 + $0xd0] sm:$0xff]
    %v1240 = vld [vmem:[#allocation4 + $0xd8] sm:$0xff]
    %v1241 = vld [vmem:[#allocation4 + $0xe0] sm:$0xff]
    %v1242 = vld [vmem:[#allocation4 + $0xe8] sm:$0xff]
    %v1243 = vld [vmem:[#allocation4 + $0xf0] sm:$0xff]
    %v1244 = vld [vmem:[#allocation4 + $0xf8] sm:$0xff]
    %v1245 = vld [vmem:[#allocation4 + $0x100] sm:$0xff]
    %v1246 = vld [vmem:[#allocation4 + $0x108] sm:$0xff]
    %v1247 = vld [vmem:[#allocation4 + $0x110] sm:$0xff]
    %v1248 = vld [vmem:[#allocation4 + $0x118] sm:$0xff]
    %v1249 = vld [vmem:[#allocation4 + $0x120] sm:$0xff]
    %v1250 = vld [vmem:[#allocation4 + $0x128] sm:$0xff]
    %v1251 = vld [vmem:[#allocation4 + $0x130] sm:$0xff]
    %v1252 = vld [vmem:[#allocation4 + $0x138] sm:$0xff]
    %v1253 = vld [vmem:[#allocation4 + $0x140] sm:$0xff]
    %v1254 = vld [vmem:[#allocation4 + $0x148] sm:$0xff]
    %v1255 = vld [vmem:[#allocation4 + $0x150] sm:$0xff]
    %v1256 = vld [vmem:[#allocation4 + $0x158] sm:$0xff]
    %v1257 = vld [vmem:[#allocation4 + $0x160] sm:$0xff]
    %v1258 = vld [vmem:[#allocation4 + $0x168] sm:$0xff]
    %v1259 = vld [vmem:[#allocation4 + $0x170] sm:$0xff]
    %v1260 = vld [vmem:[#allocation4 + $0x178] sm:$0xff]
    %v1261 = vld [vmem:[#allocation4 + $0x180] sm:$0xff]
    %v1262 = vld [vmem:[#allocation4 + $0x188] sm:$0xff]
    %v1263 = vld [vmem:[#allocation4 + $0x190] sm:$0xff]
    %v1264 = vld [vmem:[#allocation4 + $0x198] sm:$0xff]
    %v1265 = vld [vmem:[#allocation4 + $0x1a0] sm:$0xff]
    %v1266 = vld [vmem:[#allocation4 + $0x1a8] sm:$0xff]
    %v1267 = vld [vmem:[#allocation4 + $0x1b0] sm:$0xff]
    %v1268 = vld [vmem:[#allocation4 + $0x1b8] sm:$0xff]
    %v1269 = vld [vmem:[#allocation4 + $0x1c0] sm:$0xff]
    %v1270 = vld [vmem:[#allocation4 + $0x1c8] sm:$0xff]
    %v1271 = vld [vmem:[#allocation4 + $0x1d0] sm:$0xff]
    %v1272 = vld [vmem:[#allocation4 + $0x1d8] sm:$0xff]
    %v1273 = vld [vmem:[#allocation4 + $0x1e0] sm:$0xff]
    %v1274 = vld [vmem:[#allocation4 + $0x1e8] sm:$0xff]
    %v1275 = vld [vmem:[#allocation4 + $0x1f0] sm:$0xff]
    %v1276 = vld [vmem:[#allocation4 + $0x1f8] sm:$0xff]
    %v1277 = vld [vmem:[#allocation4 + $0x200] sm:$0xff]
    %v1278 = vld [vmem:[#allocation4 + $0x208] sm:$0xff]
    %v1279 = vld [vmem:[#allocation4 + $0x210] sm:$0xff]
    %v1280 = vld [vmem:[#allocation4 + $0x218] sm:$0xff]
    %v1281 = vld [vmem:[#allocation4 + $0x220] sm:$0xff]
    %v1282 = vld [vmem:[#allocation4 + $0x228] sm:$0xff]
    %v1283 = vld [vmem:[#allocation4 + $0x230] sm:$0xff]
    %v1284 = vld [vmem:[#allocation4 + $0x238] sm:$0xff]
    %v1285 = vld [vmem:[#allocation4 + $0x240] sm:$0xff]
    %v1286 = vld [vmem:[#allocation4 + $0x248] sm:$0xff]
    %v1287 = vld [vmem:[#allocation4 + $0x250] sm:$0xff]
    %v1288 = vld [vmem:[#allocation4 + $0x258] sm:$0xff]
    %v1289 = vld [vmem:[#allocation4 + $0x260] sm:$0xff]
    %v1290 = vld [vmem:[#allocation4 + $0x268] sm:$0xff]
    %v1291 = vld [vmem:[#allocation4 + $0x270] sm:$0xff]
    %v1292 = vld [vmem:[#allocation4 + $0x278] sm:$0xff]
    %v1293 = vld [vmem:[#allocation4 + $0x280] sm:$0xff]
    %v1294 = vld [vmem:[#allocation4 + $0x288] sm:$0xff]
    %v1295 = vld [vmem:[#allocation4 + $0x290] sm:$0xff]
    %v1296 = vld [vmem:[#allocation4 + $0x298] sm:$0xff]
    %v1297 = vld [vmem:[#allocation4 + $0x2a0] sm:$0xff]
    %v1298 = vld [vmem:[#allocation4 + $0x2a8] sm:$0xff]
    %v1299 = vld [vmem:[#allocation4 + $0x2b0] sm:$0xff]
    %v1300 = vld [vmem:[#allocation4 + $0x2b8] sm:$0xff]
    %v1301 = vld [vmem:[#allocation4 + $0x2c0] sm:$0xff]
    %v1302 = vld [vmem:[#allocation4 + $0x2c8] sm:$0xff]
    %v1303 = vld [vmem:[#allocation4 + $0x2d0] sm:$0xff]
    %v1304 = vld [vmem:[#allocation4 + $0x2d8] sm:$0xff]
    %v1305 = vld [vmem:[#allocation4 + $0x2e0] sm:$0xff]
    %v1306 = vld [vmem:[#allocation4 + $0x2e8] sm:$0xff]
    %v1307 = vld [vmem:[#allocation4 + $0x2f0] sm:$0xff]
    %v1308 = vld [vmem:[#allocation4 + $0x2f8] sm:$0xff]
    %v1309 = vld [vmem:[#allocation4 + $0x300] sm:$0xff]
    %v1310 = vld [vmem:[#allocation4 + $0x308] sm:$0xff]
    %v1311 = vld [vmem:[#allocation4 + $0x310] sm:$0xff]
    %v1312 = vld [vmem:[#allocation4 + $0x318] sm:$0xff]
    %v1313 = vld [vmem:[#allocation4 + $0x320] sm:$0xff]
    %v1314 = vld [vmem:[#allocation4 + $0x328] sm:$0xff]
    %v1315 = vld [vmem:[#allocation4 + $0x330] sm:$0xff]
    %v1316 = vld [vmem:[#allocation4 + $0x338] sm:$0xff]
    %v1317 = vld [vmem:[#allocation4 + $0x340] sm:$0xff]
    %v1318 = vld [vmem:[#allocation4 + $0x348] sm:$0xff]
    %v1319 = vld [vmem:[#allocation4 + $0x350] sm:$0xff]
    %v1320 = vld [vmem:[#allocation4 + $0x358] sm:$0xff]
    %v1321 = vld [vmem:[#allocation4 + $0x360] sm:$0xff]
    %v1322 = vld [vmem:[#allocation4 + $0x368] sm:$0xff]
    %v1323 = vld [vmem:[#allocation4 + $0x370] sm:$0xff]
    %v1324 = vld [vmem:[#allocation4 + $0x378] sm:$0xff]
    %v1325 = vld [vmem:[#allocation4 + $0x380] sm:$0xff]
    %v1326 = vld [vmem:[#allocation4 + $0x388] sm:$0xff]
    %v1327 = vld [vmem:[#allocation4 + $0x390] sm:$0xff]
    %v1328 = vld [vmem:[#allocation4 + $0x398] sm:$0xff]
    %v1329 = vld [vmem:[#allocation4 + $0x3a0] sm:$0xff]
    %v1330 = vld [vmem:[#allocation4 + $0x3a8] sm:$0xff]
    %v1331 = vld [vmem:[#allocation4 + $0x3b0] sm:$0xff]
    %v1332 = vld [vmem:[#allocation4 + $0x3b8] sm:$0xff]
    %v1333 = vld [vmem:[#allocation4 + $0x3c0] sm:$0xff]
    %v1334 = vld [vmem:[#allocation4 + $0x3c8] sm:$0xff]
    %v1335 = vld [vmem:[#allocation4 + $0x3d0] sm:$0xff]
    %v1336 = vld [vmem:[#allocation4 + $0x3d8] sm:$0xff]
    %v1337 = vld [vmem:[#allocation4 + $0x3e0] sm:$0xff]
    %v1338 = vld [vmem:[#allocation4 + $0x3e8] sm:$0xff]
    %v1339 = vld [vmem:[#allocation4 + $0x3f0] sm:$0xff]
    %v1340 = vld [vmem:[#allocation4 + $0x3f8] sm:$0xff]
    %v1341 = vld [vmem:[%s6] sm:$0xf]
    %v1343 = vperm.slane %v1341, 0
    %v1344 = vperm.slane %v1341, 1
    %v1345 = vperm.slane %v1341, 2
    %v1346 = vperm.slane %v1341, 3
    %v1479 = vunpack.c.l.b16 %v1213
    %v1480 = vunpack.c.h.b16 %v1213
    %v1481 = vunpack.c.l.b16 %v1214
    %v1482 = vunpack.c.h.b16 %v1214
    %v1483 = vunpack.c.l.b16 %v1215
    %v1484 = vunpack.c.h.b16 %v1215
    %v1485 = vunpack.c.l.b16 %v1216
    %v1486 = vunpack.c.h.b16 %v1216
    %v1487 = vunpack.c.l.b16 %v1217
    %v1488 = vunpack.c.h.b16 %v1217
    %v1489 = vunpack.c.l.b16 %v1218
    %v1490 = vunpack.c.h.b16 %v1218
    %v1491 = vunpack.c.l.b16 %v1219
    %v1492 = vunpack.c.h.b16 %v1219
    %v1493 = vunpack.c.l.b16 %v1220
    %v1494 = vunpack.c.h.b16 %v1220
    %v1495 = vunpack.c.l.b16 %v1221
    %v1496 = vunpack.c.h.b16 %v1221
    %v1497 = vunpack.c.l.b16 %v1222
    %v1498 = vunpack.c.h.b16 %v1222
    %v1499 = vunpack.c.l.b16 %v1223
    %v1500 = vunpack.c.h.b16 %v1223
    %v1501 = vunpack.c.l.b16 %v1224
    %v1502 = vunpack.c.h.b16 %v1224
    %v1503 = vunpack.c.l.b16 %v1225
    %v1504 = vunpack.c.h.b16 %v1225
    %v1505 = vunpack.c.l.b16 %v1226
    %v1506 = vunpack.c.h.b16 %v1226
    %v1507 = vunpack.c.l.b16 %v1227
    %v1508 = vunpack.c.h.b16 %v1227
    %v1509 = vunpack.c.l.b16 %v1228
    %v1510 = vunpack.c.h.b16 %v1228
    %v1511 = vunpack.c.l.b16 %v1229
    %v1512 = vunpack.c.h.b16 %v1229
    %v1513 = vunpack.c.l.b16 %v1230
    %v1514 = vunpack.c.h.b16 %v1230
    %v1515 = vunpack.c.l.b16 %v1231
    %v1516 = vunpack.c.h.b16 %v1231
    %v1517 = vunpack.c.l.b16 %v1232
    %v1518 = vunpack.c.h.b16 %v1232
    %v1519 = vunpack.c.l.b16 %v1233
    %v1520 = vunpack.c.h.b16 %v1233
    %v1521 = vunpack.c.l.b16 %v1234
    %v1522 = vunpack.c.h.b16 %v1234
    %v1523 = vunpack.c.l.b16 %v1235
    %v1524 = vunpack.c.h.b16 %v1235
    %v1525 = vunpack.c.l.b16 %v1236
    %v1526 = vunpack.c.h.b16 %v1236
    %v1527 = vunpack.c.l.b16 %v1237
    %v1528 = vunpack.c.h.b16 %v1237
    %v1529 = vunpack.c.l.b16 %v1238
    %v1530 = vunpack.c.h.b16 %v1238
    %v1531 = vunpack.c.l.b16 %v1239
    %v1532 = vunpack.c.h.b16 %v1239
    %v1533 = vunpack.c.l.b16 %v1240
    %v1534 = vunpack.c.h.b16 %v1240
    %v1535 = vunpack.c.l.b16 %v1241
    %v1536 = vunpack.c.h.b16 %v1241
    %v1537 = vunpack.c.l.b16 %v1242
    %v1538 = vunpack.c.h.b16 %v1242
    %v1539 = vunpack.c.l.b16 %v1243
    %v1540 = vunpack.c.h.b16 %v1243
    %v1541 = vunpack.c.l.b16 %v1244
    %v1542 = vunpack.c.h.b16 %v1244
    %v1543 = vunpack.c.l.b16 %v1245
    %v1544 = vunpack.c.h.b16 %v1245
    %v1545 = vunpack.c.l.b16 %v1246
    %v1546 = vunpack.c.h.b16 %v1246
    %v1547 = vunpack.c.l.b16 %v1247
    %v1548 = vunpack.c.h.b16 %v1247
    %v1549 = vunpack.c.l.b16 %v1248
    %v1550 = vunpack.c.h.b16 %v1248
    %v1551 = vunpack.c.l.b16 %v1249
    %v1552 = vunpack.c.h.b16 %v1249
    %v1553 = vunpack.c.l.b16 %v1250
    %v1554 = vunpack.c.h.b16 %v1250
    %v1555 = vunpack.c.l.b16 %v1251
    %v1556 = vunpack.c.h.b16 %v1251
    %v1557 = vunpack.c.l.b16 %v1252
    %v1558 = vunpack.c.h.b16 %v1252
    %v1559 = vunpack.c.l.b16 %v1253
    %v1560 = vunpack.c.h.b16 %v1253
    %v1561 = vunpack.c.l.b16 %v1254
    %v1562 = vunpack.c.h.b16 %v1254
    %v1563 = vunpack.c.l.b16 %v1255
    %v1564 = vunpack.c.h.b16 %v1255
    %v1565 = vunpack.c.l.b16 %v1256
    %v1566 = vunpack.c.h.b16 %v1256
    %v1567 = vunpack.c.l.b16 %v1257
    %v1568 = vunpack.c.h.b16 %v1257
    %v1569 = vunpack.c.l.b16 %v1258
    %v1570 = vunpack.c.h.b16 %v1258
    %v1571 = vunpack.c.l.b16 %v1259
    %v1572 = vunpack.c.h.b16 %v1259
    %v1573 = vunpack.c.l.b16 %v1260
    %v1574 = vunpack.c.h.b16 %v1260
    %v1575 = vunpack.c.l.b16 %v1261
    %v1576 = vunpack.c.h.b16 %v1261
    %v1577 = vunpack.c.l.b16 %v1262
    %v1578 = vunpack.c.h.b16 %v1262
    %v1579 = vunpack.c.l.b16 %v1263
    %v1580 = vunpack.c.h.b16 %v1263
    %v1581 = vunpack.c.l.b16 %v1264
    %v1582 = vunpack.c.h.b16 %v1264
    %v1583 = vunpack.c.l.b16 %v1265
    %v1584 = vunpack.c.h.b16 %v1265
    %v1585 = vunpack.c.l.b16 %v1266
    %v1586 = vunpack.c.h.b16 %v1266
    %v1587 = vunpack.c.l.b16 %v1267
    %v1588 = vunpack.c.h.b16 %v1267
    %v1589 = vunpack.c.l.b16 %v1268
    %v1590 = vunpack.c.h.b16 %v1268
    %v1591 = vunpack.c.l.b16 %v1269
    %v1592 = vunpack.c.h.b16 %v1269
    %v1593 = vunpack.c.l.b16 %v1270
    %v1594 = vunpack.c.h.b16 %v1270
    %v1595 = vunpack.c.l.b16 %v1271
    %v1596 = vunpack.c.h.b16 %v1271
    %v1597 = vunpack.c.l.b16 %v1272
    %v1598 = vunpack.c.h.b16 %v1272
    %v1599 = vunpack.c.l.b16 %v1273
    %v1600 = vunpack.c.h.b16 %v1273
    %v1601 = vunpack.c.l.b16 %v1274
    %v1602 = vunpack.c.h.b16 %v1274
    %v1603 = vunpack.c.l.b16 %v1275
    %v1604 = vunpack.c.h.b16 %v1275
    %v1605 = vunpack.c.l.b16 %v1276
    %v1606 = vunpack.c.h.b16 %v1276
    %v1607 = vunpack.c.l.b16 %v1277
    %v1608 = vunpack.c.h.b16 %v1277
    %v1609 = vunpack.c.l.b16 %v1278
    %v1610 = vunpack.c.h.b16 %v1278
    %v1611 = vunpack.c.l.b16 %v1279
    %v1612 = vunpack.c.h.b16 %v1279
    %v1613 = vunpack.c.l.b16 %v1280
    %v1614 = vunpack.c.h.b16 %v1280
    %v1615 = vunpack.c.l.b16 %v1281
    %v1616 = vunpack.c.h.b16 %v1281
    %v1617 = vunpack.c.l.b16 %v1282
    %v1618 = vunpack.c.h.b16 %v1282
    %v1619 = vunpack.c.l.b16 %v1283
    %v1620 = vunpack.c.h.b16 %v1283
    %v1621 = vunpack.c.l.b16 %v1284
    %v1622 = vunpack.c.h.b16 %v1284
    %v1623 = vunpack.c.l.b16 %v1285
    %v1624 = vunpack.c.h.b16 %v1285
    %v1625 = vunpack.c.l.b16 %v1286
    %v1626 = vunpack.c.h.b16 %v1286
    %v1627 = vunpack.c.l.b16 %v1287
    %v1628 = vunpack.c.h.b16 %v1287
    %v1629 = vunpack.c.l.b16 %v1288
    %v1630 = vunpack.c.h.b16 %v1288
    %v1631 = vunpack.c.l.b16 %v1289
    %v1632 = vunpack.c.h.b16 %v1289
    %v1633 = vunpack.c.l.b16 %v1290
    %v1634 = vunpack.c.h.b16 %v1290
    %v1635 = vunpack.c.l.b16 %v1291
    %v1636 = vunpack.c.h.b16 %v1291
    %v1637 = vunpack.c.l.b16 %v1292
    %v1638 = vunpack.c.h.b16 %v1292
    %v1639 = vunpack.c.l.b16 %v1293
    %v1640 = vunpack.c.h.b16 %v1293
    %v1641 = vunpack.c.l.b16 %v1294
    %v1642 = vunpack.c.h.b16 %v1294
    %v1643 = vunpack.c.l.b16 %v1295
    %v1644 = vunpack.c.h.b16 %v1295
    %v1645 = vunpack.c.l.b16 %v1296
    %v1646 = vunpack.c.h.b16 %v1296
    %v1647 = vunpack.c.l.b16 %v1297
    %v1648 = vunpack.c.h.b16 %v1297
    %v1649 = vunpack.c.l.b16 %v1298
    %v1650 = vunpack.c.h.b16 %v1298
    %v1651 = vunpack.c.l.b16 %v1299
    %v1652 = vunpack.c.h.b16 %v1299
    %v1653 = vunpack.c.l.b16 %v1300
    %v1654 = vunpack.c.h.b16 %v1300
    %v1655 = vunpack.c.l.b16 %v1301
    %v1656 = vunpack.c.h.b16 %v1301
    %v1657 = vunpack.c.l.b16 %v1302
    %v1658 = vunpack.c.h.b16 %v1302
    %v1659 = vunpack.c.l.b16 %v1303
    %v1660 = vunpack.c.h.b16 %v1303
    %v1661 = vunpack.c.l.b16 %v1304
    %v1662 = vunpack.c.h.b16 %v1304
    %v1663 = vunpack.c.l.b16 %v1305
    %v1664 = vunpack.c.h.b16 %v1305
    %v1665 = vunpack.c.l.b16 %v1306
    %v1666 = vunpack.c.h.b16 %v1306
    %v1667 = vunpack.c.l.b16 %v1307
    %v1668 = vunpack.c.h.b16 %v1307
    %v1669 = vunpack.c.l.b16 %v1308
    %v1670 = vunpack.c.h.b16 %v1308
    %v1671 = vunpack.c.l.b16 %v1309
    %v1672 = vunpack.c.h.b16 %v1309
    %v1673 = vunpack.c.l.b16 %v1310
    %v1674 = vunpack.c.h.b16 %v1310
    %v1675 = vunpack.c.l.b16 %v1311
    %v1676 = vunpack.c.h.b16 %v1311
    %v1677 = vunpack.c.l.b16 %v1312
    %v1678 = vunpack.c.h.b16 %v1312
    %v1679 = vunpack.c.l.b16 %v1313
    %v1680 = vunpack.c.h.b16 %v1313
    %v1681 = vunpack.c.l.b16 %v1314
    %v1682 = vunpack.c.h.b16 %v1314
    %v1683 = vunpack.c.l.b16 %v1315
    %v1684 = vunpack.c.h.b16 %v1315
    %v1685 = vunpack.c.l.b16 %v1316
    %v1686 = vunpack.c.h.b16 %v1316
    %v1687 = vunpack.c.l.b16 %v1317
    %v1688 = vunpack.c.h.b16 %v1317
    %v1689 = vunpack.c.l.b16 %v1318
    %v1690 = vunpack.c.h.b16 %v1318
    %v1691 = vunpack.c.l.b16 %v1319
    %v1692 = vunpack.c.h.b16 %v1319
    %v1693 = vunpack.c.l.b16 %v1320
    %v1694 = vunpack.c.h.b16 %v1320
    %v1695 = vunpack.c.l.b16 %v1321
    %v1696 = vunpack.c.h.b16 %v1321
    %v1697 = vunpack.c.l.b16 %v1322
    %v1698 = vunpack.c.h.b16 %v1322
    %v1699 = vunpack.c.l.b16 %v1323
    %v1700 = vunpack.c.h.b16 %v1323
    %v1701 = vunpack.c.l.b16 %v1324
    %v1702 = vunpack.c.h.b16 %v1324
    %v1703 = vunpack.c.l.b16 %v1325
    %v1704 = vunpack.c.h.b16 %v1325
    %v1705 = vunpack.c.l.b16 %v1326
    %v1706 = vunpack.c.h.b16 %v1326
    %v1707 = vunpack.c.l.b16 %v1327
    %v1708 = vunpack.c.h.b16 %v1327
    %v1709 = vunpack.c.l.b16 %v1328
    %v1710 = vunpack.c.h.b16 %v1328
    %v1711 = vunpack.c.l.b16 %v1329
    %v1712 = vunpack.c.h.b16 %v1329
    %v1713 = vunpack.c.l.b16 %v1330
    %v1714 = vunpack.c.h.b16 %v1330
    %v1715 = vunpack.c.l.b16 %v1331
    %v1716 = vunpack.c.h.b16 %v1331
    %v1717 = vunpack.c.l.b16 %v1332
    %v1718 = vunpack.c.h.b16 %v1332
    %v1719 = vunpack.c.l.b16 %v1333
    %v1720 = vunpack.c.h.b16 %v1333
    %v1721 = vunpack.c.l.b16 %v1334
    %v1722 = vunpack.c.h.b16 %v1334
    %v1723 = vunpack.c.l.b16 %v1335
    %v1724 = vunpack.c.h.b16 %v1335
    %v1725 = vunpack.c.l.b16 %v1336
    %v1726 = vunpack.c.h.b16 %v1336
    %v1727 = vunpack.c.l.b16 %v1337
    %v1728 = vunpack.c.h.b16 %v1337
    %v1729 = vunpack.c.l.b16 %v1338
    %v1730 = vunpack.c.h.b16 %v1338
    %v1731 = vunpack.c.l.b16 %v1339
    %v1732 = vunpack.c.h.b16 %v1339
    %v1733 = vunpack.c.l.b16 %v1340
    %v1734 = vunpack.c.h.b16 %v1340
    %v1735 = vpack.c.b16 %v1483, %v1479
    %v1736 = vpack.c.b16 %v1484, %v1480
    %v1737 = vpack.c.b16 %v1485, %v1481
    %v1738 = vpack.c.b16 %v1486, %v1482
    %v1739 = vpack.c.b16 %v1491, %v1487
    %v1740 = vpack.c.b16 %v1492, %v1488
    %v1741 = vpack.c.b16 %v1493, %v1489
    %v1742 = vpack.c.b16 %v1494, %v1490
    %v1743 = vpack.c.b16 %v1499, %v1495
    %v1744 = vpack.c.b16 %v1500, %v1496
    %v1745 = vpack.c.b16 %v1501, %v1497
    %v1746 = vpack.c.b16 %v1502, %v1498
    %v1747 = vpack.c.b16 %v1507, %v1503
    %v1748 = vpack.c.b16 %v1508, %v1504
    %v1749 = vpack.c.b16 %v1509, %v1505
    %v1750 = vpack.c.b16 %v1510, %v1506
    %v1751 = vpack.c.b16 %v1515, %v1511
    %v1752 = vpack.c.b16 %v1516, %v1512
    %v1753 = vpack.c.b16 %v1517, %v1513
    %v1754 = vpack.c.b16 %v1518, %v1514
    %v1755 = vpack.c.b16 %v1523, %v1519
    %v1756 = vpack.c.b16 %v1524, %v1520
    %v1757 = vpack.c.b16 %v1525, %v1521
    %v1758 = vpack.c.b16 %v1526, %v1522
    %v1759 = vpack.c.b16 %v1531, %v1527
    %v1760 = vpack.c.b16 %v1532, %v1528
    %v1761 = vpack.c.b16 %v1533, %v1529
    %v1762 = vpack.c.b16 %v1534, %v1530
    %v1763 = vpack.c.b16 %v1539, %v1535
    %v1764 = vpack.c.b16 %v1540, %v1536
    %v1765 = vpack.c.b16 %v1541, %v1537
    %v1766 = vpack.c.b16 %v1542, %v1538
    %v1767 = vpack.c.b16 %v1547, %v1543
    %v1768 = vpack.c.b16 %v1548, %v1544
    %v1769 = vpack.c.b16 %v1549, %v1545
    %v1770 = vpack.c.b16 %v1550, %v1546
    %v1771 = vpack.c.b16 %v1555, %v1551
    %v1772 = vpack.c.b16 %v1556, %v1552
    %v1773 = vpack.c.b16 %v1557, %v1553
    %v1774 = vpack.c.b16 %v1558, %v1554
    %v1775 = vpack.c.b16 %v1563, %v1559
    %v1776 = vpack.c.b16 %v1564, %v1560
    %v1777 = vpack.c.b16 %v1565, %v1561
    %v1778 = vpack.c.b16 %v1566, %v1562
    %v1779 = vpack.c.b16 %v1571, %v1567
    %v1780 = vpack.c.b16 %v1572, %v1568
    %v1781 = vpack.c.b16 %v1573, %v1569
    %v1782 = vpack.c.b16 %v1574, %v1570
    %v1783 = vpack.c.b16 %v1579, %v1575
    %v1784 = vpack.c.b16 %v1580, %v1576
    %v1785 = vpack.c.b16 %v1581, %v1577
    %v1786 = vpack.c.b16 %v1582, %v1578
    %v1787 = vpack.c.b16 %v1587, %v1583
    %v1788 = vpack.c.b16 %v1588, %v1584
    %v1789 = vpack.c.b16 %v1589, %v1585
    %v1790 = vpack.c.b16 %v1590, %v1586
    %v1791 = vpack.c.b16 %v1595, %v1591
    %v1792 = vpack.c.b16 %v1596, %v1592
    %v1793 = vpack.c.b16 %v1597, %v1593
    %v1794 = vpack.c.b16 %v1598, %v1594
    %v1795 = vpack.c.b16 %v1603, %v1599
    %v1796 = vpack.c.b16 %v1604, %v1600
    %v1797 = vpack.c.b16 %v1605, %v1601
    %v1798 = vpack.c.b16 %v1606, %v1602
    %v1799 = vpack.c.b16 %v1611, %v1607
    %v1800 = vpack.c.b16 %v1612, %v1608
    %v1801 = vpack.c.b16 %v1613, %v1609
    %v1802 = vpack.c.b16 %v1614, %v1610
    %v1803 = vpack.c.b16 %v1619, %v1615
    %v1804 = vpack.c.b16 %v1620, %v1616
    %v1805 = vpack.c.b16 %v1621, %v1617
    %v1806 = vpack.c.b16 %v1622, %v1618
    %v1807 = vpack.c.b16 %v1627, %v1623
    %v1808 = vpack.c.b16 %v1628, %v1624
    %v1809 = vpack.c.b16 %v1629, %v1625
    %v1810 = vpack.c.b16 %v1630, %v1626
    %v1811 = vpack.c.b16 %v1635, %v1631
    %v1812 = vpack.c.b16 %v1636, %v1632
    %v1813 = vpack.c.b16 %v1637, %v1633
    %v1814 = vpack.c.b16 %v1638, %v1634
    %v1815 = vpack.c.b16 %v1643, %v1639
    %v1816 = vpack.c.b16 %v1644, %v1640
    %v1817 = vpack.c.b16 %v1645, %v1641
    %v1818 = vpack.c.b16 %v1646, %v1642
    %v1819 = vpack.c.b16 %v1651, %v1647
    %v1820 = vpack.c.b16 %v1652, %v1648
    %v1821 = vpack.c.b16 %v1653, %v1649
    %v1822 = vpack.c.b16 %v1654, %v1650
    %v1823 = vpack.c.b16 %v1659, %v1655
    %v1824 = vpack.c.b16 %v1660, %v1656
    %v1825 = vpack.c.b16 %v1661, %v1657
    %v1826 = vpack.c.b16 %v1662, %v1658
    %v1827 = vpack.c.b16 %v1667, %v1663
    %v1828 = vpack.c.b16 %v1668, %v1664
    %v1829 = vpack.c.b16 %v1669, %v1665
    %v1830 = vpack.c.b16 %v1670, %v1666
    %v1831 = vpack.c.b16 %v1675, %v1671
    %v1832 = vpack.c.b16 %v1676, %v1672
    %v1833 = vpack.c.b16 %v1677, %v1673
    %v1834 = vpack.c.b16 %v1678, %v1674
    %v1835 = vpack.c.b16 %v1683, %v1679
    %v1836 = vpack.c.b16 %v1684, %v1680
    %v1837 = vpack.c.b16 %v1685, %v1681
    %v1838 = vpack.c.b16 %v1686, %v1682
    %v1839 = vpack.c.b16 %v1691, %v1687
    %v1840 = vpack.c.b16 %v1692, %v1688
    %v1841 = vpack.c.b16 %v1693, %v1689
    %v1842 = vpack.c.b16 %v1694, %v1690
    %v1843 = vpack.c.b16 %v1699, %v1695
    %v1844 = vpack.c.b16 %v1700, %v1696
    %v1845 = vpack.c.b16 %v1701, %v1697
    %v1846 = vpack.c.b16 %v1702, %v1698
    %v1847 = vpack.c.b16 %v1707, %v1703
    %v1848 = vpack.c.b16 %v1708, %v1704
    %v1849 = vpack.c.b16 %v1709, %v1705
    %v1850 = vpack.c.b16 %v1710, %v1706
    %v1851 = vpack.c.b16 %v1715, %v1711
    %v1852 = vpack.c.b16 %v1716, %v1712
    %v1853 = vpack.c.b16 %v1717, %v1713
    %v1854 = vpack.c.b16 %v1718, %v1714
    %v1855 = vpack.c.b16 %v1723, %v1719
    %v1856 = vpack.c.b16 %v1724, %v1720
    %v1857 = vpack.c.b16 %v1725, %v1721
    %v1858 = vpack.c.b16 %v1726, %v1722
    %v1859 = vpack.c.b16 %v1731, %v1727
    %v1860 = vpack.c.b16 %v1732, %v1728
    %v1861 = vpack.c.b16 %v1733, %v1729
    %v1862 = vpack.c.b16 %v1734, %v1730
    %1991 = vmatpush.bf16.msra.mxu0 %v1763
    %1992 = vmatpush.bf16.msra.mxu0 %v1759
    %1993 = vmatpush.bf16.msra.mxu0 %v1755
    %1994 = vmatpush.bf16.msra.mxu0 %v1751
    %1995 = vmatpush.bf16.msra.mxu0 %v1747
    %1996 = vmatpush.bf16.msra.mxu0 %v1743
    %1997 = vmatpush.bf16.msra.mxu0 %v1739
    %1998 = vmatpush.bf16.msra.mxu0 %v1735
    %1999 = vmatmul.bf16.gmra.mxu0 %v1209
    %v2000 = vpop.f32.mrf.mxu0
    %v2001 = vadd.f32 %v1343, %v2000
    %v2002 = vpop.f32.mrf.mxu0
    %v2003 = vadd.f32 %v1343, %v2002
    %2004 = vdwg.mxu0
    %2005 = vmatpush.bf16.msra.mxu0 %v1795
    %2006 = vmatpush.bf16.msra.mxu0 %v1791
    %2007 = vmatpush.bf16.msra.mxu0 %v1787
    %2008 = vmatpush.bf16.msra.mxu0 %v1783
    %2009 = vmatpush.bf16.msra.mxu0 %v1779
    %2010 = vmatpush.bf16.msra.mxu0 %v1775
    %2011 = vmatpush.bf16.msra.mxu0 %v1771
    %2012 = vmatpush.bf16.msra.mxu0 %v1767
    %2013 = vmatmul.bf16.gmra.mxu0 %v1210
    %v2014 = vpop.f32.mrf.mxu0
    %v2015 = vadd.f32 %v2001, %v2014
    %v2016 = vpop.f32.mrf.mxu0
    %v2017 = vadd.f32 %v2003, %v2016
    %2018 = vdwg.mxu0
    %2019 = vmatpush.bf16.msra.mxu0 %v1827
    %2020 = vmatpush.bf16.msra.mxu0 %v1823
    %2021 = vmatpush.bf16.msra.mxu0 %v1819
    %2022 = vmatpush.bf16.msra.mxu0 %v1815
    %2023 = vmatpush.bf16.msra.mxu0 %v1811
    %2024 = vmatpush.bf16.msra.mxu0 %v1807
    %2025 = vmatpush.bf16.msra.mxu0 %v1803
    %2026 = vmatpush.bf16.msra.mxu0 %v1799
    %2027 = vmatmul.bf16.gmra.mxu0 %v1211
    %v2028 = vpop.f32.mrf.mxu0
    %v2029 = vadd.f32 %v2015, %v2028
    %v2030 = vpop.f32.mrf.mxu0
    %v2031 = vadd.f32 %v2017, %v2030
    %2032 = vdwg.mxu0
    %2033 = vmatpush.bf16.msra.mxu0 %v1859
    %2034 = vmatpush.bf16.msra.mxu0 %v1855
    %2035 = vmatpush.bf16.msra.mxu0 %v1851
    %2036 = vmatpush.bf16.msra.mxu0 %v1847
    %2037 = vmatpush.bf16.msra.mxu0 %v1843
    %2038 = vmatpush.bf16.msra.mxu0 %v1839
    %2039 = vmatpush.bf16.msra.mxu0 %v1835
    %2040 = vmatpush.bf16.msra.mxu0 %v1831
    %2041 = vmatmul.bf16.gmra.mxu0 %v1212
    %v2042 = vpop.f32.mrf.mxu0
    %v2043 = vadd.f32 %v2029, %v2042
    %v2044 = vpop.f32.mrf.mxu0
    %v2045 = vadd.f32 %v2031, %v2044
    %2046 = vdwg.mxu0
    %2047 = vmatpush.bf16.msra.mxu0 %v1764
    %2048 = vmatpush.bf16.msra.mxu0 %v1760
    %2049 = vmatpush.bf16.msra.mxu0 %v1756
    %2050 = vmatpush.bf16.msra.mxu0 %v1752
    %2051 = vmatpush.bf16.msra.mxu0 %v1748
    %2052 = vmatpush.bf16.msra.mxu0 %v1744
    %2053 = vmatpush.bf16.msra.mxu0 %v1740
    %2054 = vmatpush.bf16.msra.mxu0 %v1736
    %2055 = vmatmul.bf16.gmra.mxu0 %v1209
    %v2056 = vpop.f32.mrf.mxu0
    %v2057 = vadd.f32 %v1344, %v2056
    %v2058 = vpop.f32.mrf.mxu0
    %v2059 = vadd.f32 %v1344, %v2058
    %2060 = vdwg.mxu0
    %2061 = vmatpush.bf16.msra.mxu0 %v1796
    %2062 = vmatpush.bf16.msra.mxu0 %v1792
    %2063 = vmatpush.bf16.msra.mxu0 %v1788
    %2064 = vmatpush.bf16.msra.mxu0 %v1784
    %2065 = vmatpush.bf16.msra.mxu0 %v1780
    %2066 = vmatpush.bf16.msra.mxu0 %v1776
    %2067 = vmatpush.bf16.msra.mxu0 %v1772
    %2068 = vmatpush.bf16.msra.mxu0 %v1768
    %2069 = vmatmul.bf16.gmra.mxu0 %v1210
    %v2070 = vpop.f32.mrf.mxu0
    %v2071 = vadd.f32 %v2057, %v2070
    %v2072 = vpop.f32.mrf.mxu0
    %v2073 = vadd.f32 %v2059, %v2072
    %2074 = vdwg.mxu0
    %2075 = vmatpush.bf16.msra.mxu0 %v1828
    %2076 = vmatpush.bf16.msra.mxu0 %v1824
    %2077 = vmatpush.bf16.msra.mxu0 %v1820
    %2078 = vmatpush.bf16.msra.mxu0 %v1816
    %2079 = vmatpush.bf16.msra.mxu0 %v1812
    %2080 = vmatpush.bf16.msra.mxu0 %v1808
    %2081 = vmatpush.bf16.msra.mxu0 %v1804
    %2082 = vmatpush.bf16.msra.mxu0 %v1800
    %2083 = vmatmul.bf16.gmra.mxu0 %v1211
    %v2084 = vpop.f32.mrf.mxu0
    %v2085 = vadd.f32 %v2071, %v2084
    %v2086 = vpop.f32.mrf.mxu0
    %v2087 = vadd.f32 %v2073, %v2086
    %2088 = vdwg.mxu0
    %2089 = vmatpush.bf16.msra.mxu0 %v1860
    %2090 = vmatpush.bf16.msra.mxu0 %v1856
    %2091 = vmatpush.bf16.msra.mxu0 %v1852
    %2092 = vmatpush.bf16.msra.mxu0 %v1848
    %2093 = vmatpush.bf16.msra.mxu0 %v1844
    %2094 = vmatpush.bf16.msra.mxu0 %v1840
    %2095 = vmatpush.bf16.msra.mxu0 %v1836
    %2096 = vmatpush.bf16.msra.mxu0 %v1832
    %2097 = vmatmul.bf16.gmra.mxu0 %v1212
    %v2098 = vpop.f32.mrf.mxu0
    %v2099 = vadd.f32 %v2085, %v2098
    %v2100 = vpop.f32.mrf.mxu0
    %v2101 = vadd.f32 %v2087, %v2100
    %2102 = vdwg.mxu0
    %2103 = vmatpush.bf16.msra.mxu0 %v1765
    %2104 = vmatpush.bf16.msra.mxu0 %v1761
    %2105 = vmatpush.bf16.msra.mxu0 %v1757
    %2106 = vmatpush.bf16.msra.mxu0 %v1753
    %2107 = vmatpush.bf16.msra.mxu0 %v1749
    %2108 = vmatpush.bf16.msra.mxu0 %v1745
    %2109 = vmatpush.bf16.msra.mxu0 %v1741
    %2110 = vmatpush.bf16.msra.mxu0 %v1737
    %2111 = vmatmul.bf16.gmra.mxu0 %v1209
    %v2112 = vpop.f32.mrf.mxu0
    %v2113 = vadd.f32 %v1345, %v2112
    %v2114 = vpop.f32.mrf.mxu0
    %v2115 = vadd.f32 %v1345, %v2114
    %2116 = vdwg.mxu0
    %2117 = vmatpush.bf16.msra.mxu0 %v1797
    %2118 = vmatpush.bf16.msra.mxu0 %v1793
    %2119 = vmatpush.bf16.msra.mxu0 %v1789
    %2120 = vmatpush.bf16.msra.mxu0 %v1785
    %2121 = vmatpush.bf16.msra.mxu0 %v1781
    %2122 = vmatpush.bf16.msra.mxu0 %v1777
    %2123 = vmatpush.bf16.msra.mxu0 %v1773
    %2124 = vmatpush.bf16.msra.mxu0 %v1769
    %2125 = vmatmul.bf16.gmra.mxu0 %v1210
    %v2126 = vpop.f32.mrf.mxu0
    %v2127 = vadd.f32 %v2113, %v2126
    %v2128 = vpop.f32.mrf.mxu0
    %v2129 = vadd.f32 %v2115, %v2128
    %2130 = vdwg.mxu0
    %2131 = vmatpush.bf16.msra.mxu0 %v1829
    %2132 = vmatpush.bf16.msra.mxu0 %v1825
    %2133 = vmatpush.bf16.msra.mxu0 %v1821
    %2134 = vmatpush.bf16.msra.mxu0 %v1817
    %2135 = vmatpush.bf16.msra.mxu0 %v1813
    %2136 = vmatpush.bf16.msra.mxu0 %v1809
    %2137 = vmatpush.bf16.msra.mxu0 %v1805
    %2138 = vmatpush.bf16.msra.mxu0 %v1801
    %2139 = vmatmul.bf16.gmra.mxu0 %v1211
    %v2140 = vpop.f32.mrf.mxu0
    %v2141 = vadd.f32 %v2127, %v2140
    %v2142 = vpop.f32.mrf.mxu0
    %v2143 = vadd.f32 %v2129, %v2142
    %2144 = vdwg.mxu0
    %2145 = vmatpush.bf16.msra.mxu0 %v1861
    %2146 = vmatpush.bf16.msra.mxu0 %v1857
    %2147 = vmatpush.bf16.msra.mxu0 %v1853
    %2148 = vmatpush.bf16.msra.mxu0 %v1849
    %2149 = vmatpush.bf16.msra.mxu0 %v1845
    %2150 = vmatpush.bf16.msra.mxu0 %v1841
    %2151 = vmatpush.bf16.msra.mxu0 %v1837
    %2152 = vmatpush.bf16.msra.mxu0 %v1833
    %2153 = vmatmul.bf16.gmra.mxu0 %v1212
    %v2154 = vpop.f32.mrf.mxu0
    %v2155 = vadd.f32 %v2141, %v2154
    %v2156 = vpop.f32.mrf.mxu0
    %v2157 = vadd.f32 %v2143, %v2156
    %2158 = vdwg.mxu0
    %2159 = vmatpush.bf16.msra.mxu0 %v1766
    %2160 = vmatpush.bf16.msra.mxu0 %v1762
    %2161 = vmatpush.bf16.msra.mxu0 %v1758
    %2162 = vmatpush.bf16.msra.mxu0 %v1754
    %2163 = vmatpush.bf16.msra.mxu0 %v1750
    %2164 = vmatpush.bf16.msra.mxu0 %v1746
    %2165 = vmatpush.bf16.msra.mxu0 %v1742
    %2166 = vmatpush.bf16.msra.mxu0 %v1738
    %2167 = vmatmul.bf16.gmra.mxu0 %v1209
    %v2168 = vpop.f32.mrf.mxu0
    %v2169 = vadd.f32 %v1346, %v2168
    %v2170 = vpop.f32.mrf.mxu0
    %v2171 = vadd.f32 %v1346, %v2170
    %2172 = vdwg.mxu0
    %2173 = vmatpush.bf16.msra.mxu0 %v1798
    %2174 = vmatpush.bf16.msra.mxu0 %v1794
    %2175 = vmatpush.bf16.msra.mxu0 %v1790
    %2176 = vmatpush.bf16.msra.mxu0 %v1786
    %2177 = vmatpush.bf16.msra.mxu0 %v1782
    %2178 = vmatpush.bf16.msra.mxu0 %v1778
    %2179 = vmatpush.bf16.msra.mxu0 %v1774
    %2180 = vmatpush.bf16.msra.mxu0 %v1770
    %2181 = vmatmul.bf16.gmra.mxu0 %v1210
    %v2182 = vpop.f32.mrf.mxu0
    %v2183 = vadd.f32 %v2169, %v2182
    %v2184 = vpop.f32.mrf.mxu0
    %v2185 = vadd.f32 %v2171, %v2184
    %2186 = vdwg.mxu0
    %2187 = vmatpush.bf16.msra.mxu0 %v1830
    %2188 = vmatpush.bf16.msra.mxu0 %v1826
    %2189 = vmatpush.bf16.msra.mxu0 %v1822
    %2190 = vmatpush.bf16.msra.mxu0 %v1818
    %2191 = vmatpush.bf16.msra.mxu0 %v1814
    %2192 = vmatpush.bf16.msra.mxu0 %v1810
    %2193 = vmatpush.bf16.msra.mxu0 %v1806
    %2194 = vmatpush.bf16.msra.mxu0 %v1802
    %2195 = vmatmul.bf16.gmra.mxu0 %v1211
    %v2196 = vpop.f32.mrf.mxu0
    %v2197 = vadd.f32 %v2183, %v2196
    %v2198 = vpop.f32.mrf.mxu0
    %v2199 = vadd.f32 %v2185, %v2198
    %2200 = vdwg.mxu0
    %2201 = vmatpush.bf16.msra.mxu0 %v1862
    %2202 = vmatpush.bf16.msra.mxu0 %v1858
    %2203 = vmatpush.bf16.msra.mxu0 %v1854
    %2204 = vmatpush.bf16.msra.mxu0 %v1850
    %2205 = vmatpush.bf16.msra.mxu0 %v1846
    %2206 = vmatpush.bf16.msra.mxu0 %v1842
    %2207 = vmatpush.bf16.msra.mxu0 %v1838
    %2208 = vmatpush.bf16.msra.mxu0 %v1834
    %2209 = vmatmul.bf16.gmra.mxu0 %v1212
    %v2210 = vpop.f32.mrf.mxu0
    %v2211 = vadd.f32 %v2197, %v2210
    %v2212 = vpop.f32.mrf.mxu0
    %v2213 = vadd.f32 %v2199, %v2212
    %2214 = vdwg.mxu0
    %v2215 = vmax.f32 %v2043, 0.0
    %v2216 = vmax.f32 %v2099, 0.0
    %v2217 = vmax.f32 %v2155, 0.0
    %v2218 = vmax.f32 %v2211, 0.0
    %v2219 = vmax.f32 %v2045, 0.0
    %v2220 = vmax.f32 %v2101, 0.0
    %v2221 = vmax.f32 %v2157, 0.0
    %v2222 = vmax.f32 %v2213, 0.0
    %v2223 = vpack.c.bf16 %v2219, %v2215
    %v2224 = vpack.c.bf16 %v2220, %v2216
    %v2225 = vpack.c.bf16 %v2221, %v2217
    %v2226 = vpack.c.bf16 %v2222, %v2218
    %v2227 = vld [vmem:[#allocation6] sm:$0xff]
    %v2228 = vld [vmem:[#allocation6 + $0x8] sm:$0xff]
    %v2229 = vld [vmem:[#allocation6 + $0x10] sm:$0xff]
    %v2230 = vld [vmem:[#allocation6 + $0x18] sm:$0xff]
    %v2231 = vld [vmem:[#allocation6 + $0x20] sm:$0xff]
    %v2232 = vld [vmem:[#allocation6 + $0x28] sm:$0xff]
    %v2233 = vld [vmem:[#allocation6 + $0x30] sm:$0xff]
    %v2234 = vld [vmem:[#allocation6 + $0x38] sm:$0xff]
    %v2235 = vld [vmem:[#allocation6 + $0x40] sm:$0xff]
    %v2236 = vld [vmem:[#allocation6 + $0x48] sm:$0xff]
    %v2237 = vld [vmem:[#allocation6 + $0x50] sm:$0xff]
    %v2238 = vld [vmem:[#allocation6 + $0x58] sm:$0xff]
    %v2239 = vld [vmem:[#allocation6 + $0x60] sm:$0xff]
    %v2240 = vld [vmem:[#allocation6 + $0x68] sm:$0xff]
    %v2241 = vld [vmem:[#allocation6 + $0x70] sm:$0xff]
    %v2242 = vld [vmem:[#allocation6 + $0x78] sm:$0xff]
    %v2243 = vld [vmem:[#allocation6 + $0x80] sm:$0xff]
    %v2244 = vld [vmem:[#allocation6 + $0x88] sm:$0xff]
    %v2245 = vld [vmem:[#allocation6 + $0x90] sm:$0xff]
    %v2246 = vld [vmem:[#allocation6 + $0x98] sm:$0xff]
    %v2247 = vld [vmem:[#allocation6 + $0xa0] sm:$0xff]
    %v2248 = vld [vmem:[#allocation6 + $0xa8] sm:$0xff]
    %v2249 = vld [vmem:[#allocation6 + $0xb0] sm:$0xff]
    %v2250 = vld [vmem:[#allocation6 + $0xb8] sm:$0xff]
    %v2251 = vld [vmem:[#allocation6 + $0xc0] sm:$0xff]
    %v2252 = vld [vmem:[#allocation6 + $0xc8] sm:$0xff]
    %v2253 = vld [vmem:[#allocation6 + $0xd0] sm:$0xff]
    %v2254 = vld [vmem:[#allocation6 + $0xd8] sm:$0xff]
    %v2255 = vld [vmem:[#allocation6 + $0xe0] sm:$0xff]
    %v2256 = vld [vmem:[#allocation6 + $0xe8] sm:$0xff]
    %v2257 = vld [vmem:[#allocation6 + $0xf0] sm:$0xff]
    %v2258 = vld [vmem:[#allocation6 + $0xf8] sm:$0xff]
    %v2259 = vld [vmem:[#allocation6 + $0x100] sm:$0xff]
    %v2260 = vld [vmem:[#allocation6 + $0x108] sm:$0xff]
    %v2261 = vld [vmem:[#allocation6 + $0x110] sm:$0xff]
    %v2262 = vld [vmem:[#allocation6 + $0x118] sm:$0xff]
    %v2263 = vld [vmem:[#allocation6 + $0x120] sm:$0xff]
    %v2264 = vld [vmem:[#allocation6 + $0x128] sm:$0xff]
    %v2265 = vld [vmem:[#allocation6 + $0x130] sm:$0xff]
    %v2266 = vld [vmem:[#allocation6 + $0x138] sm:$0xff]
    %v2267 = vld [vmem:[#allocation6 + $0x140] sm:$0xff]
    %v2268 = vld [vmem:[#allocation6 + $0x148] sm:$0xff]
    %v2269 = vld [vmem:[#allocation6 + $0x150] sm:$0xff]
    %v2270 = vld [vmem:[#allocation6 + $0x158] sm:$0xff]
    %v2271 = vld [vmem:[#allocation6 + $0x160] sm:$0xff]
    %v2272 = vld [vmem:[#allocation6 + $0x168] sm:$0xff]
    %v2273 = vld [vmem:[#allocation6 + $0x170] sm:$0xff]
    %v2274 = vld [vmem:[#allocation6 + $0x178] sm:$0xff]
    %v2275 = vld [vmem:[#allocation6 + $0x180] sm:$0xff]
    %v2276 = vld [vmem:[#allocation6 + $0x188] sm:$0xff]
    %v2277 = vld [vmem:[#allocation6 + $0x190] sm:$0xff]
    %v2278 = vld [vmem:[#allocation6 + $0x198] sm:$0xff]
    %v2279 = vld [vmem:[#allocation6 + $0x1a0] sm:$0xff]
    %v2280 = vld [vmem:[#allocation6 + $0x1a8] sm:$0xff]
    %v2281 = vld [vmem:[#allocation6 + $0x1b0] sm:$0xff]
    %v2282 = vld [vmem:[#allocation6 + $0x1b8] sm:$0xff]
    %v2283 = vld [vmem:[#allocation6 + $0x1c0] sm:$0xff]
    %v2284 = vld [vmem:[#allocation6 + $0x1c8] sm:$0xff]
    %v2285 = vld [vmem:[#allocation6 + $0x1d0] sm:$0xff]
    %v2286 = vld [vmem:[#allocation6 + $0x1d8] sm:$0xff]
    %v2287 = vld [vmem:[#allocation6 + $0x1e0] sm:$0xff]
    %v2288 = vld [vmem:[#allocation6 + $0x1e8] sm:$0xff]
    %v2289 = vld [vmem:[#allocation6 + $0x1f0] sm:$0xff]
    %v2290 = vld [vmem:[#allocation6 + $0x1f8] sm:$0xff]
    %v2291 = vld [vmem:[#allocation6 + $0x200] sm:$0xff]
    %v2292 = vld [vmem:[#allocation6 + $0x208] sm:$0xff]
    %v2293 = vld [vmem:[#allocation6 + $0x210] sm:$0xff]
    %v2294 = vld [vmem:[#allocation6 + $0x218] sm:$0xff]
    %v2295 = vld [vmem:[#allocation6 + $0x220] sm:$0xff]
    %v2296 = vld [vmem:[#allocation6 + $0x228] sm:$0xff]
    %v2297 = vld [vmem:[#allocation6 + $0x230] sm:$0xff]
    %v2298 = vld [vmem:[#allocation6 + $0x238] sm:$0xff]
    %v2299 = vld [vmem:[#allocation6 + $0x240] sm:$0xff]
    %v2300 = vld [vmem:[#allocation6 + $0x248] sm:$0xff]
    %v2301 = vld [vmem:[#allocation6 + $0x250] sm:$0xff]
    %v2302 = vld [vmem:[#allocation6 + $0x258] sm:$0xff]
    %v2303 = vld [vmem:[#allocation6 + $0x260] sm:$0xff]
    %v2304 = vld [vmem:[#allocation6 + $0x268] sm:$0xff]
    %v2305 = vld [vmem:[#allocation6 + $0x270] sm:$0xff]
    %v2306 = vld [vmem:[#allocation6 + $0x278] sm:$0xff]
    %v2307 = vld [vmem:[#allocation6 + $0x280] sm:$0xff]
    %v2308 = vld [vmem:[#allocation6 + $0x288] sm:$0xff]
    %v2309 = vld [vmem:[#allocation6 + $0x290] sm:$0xff]
    %v2310 = vld [vmem:[#allocation6 + $0x298] sm:$0xff]
    %v2311 = vld [vmem:[#allocation6 + $0x2a0] sm:$0xff]
    %v2312 = vld [vmem:[#allocation6 + $0x2a8] sm:$0xff]
    %v2313 = vld [vmem:[#allocation6 + $0x2b0] sm:$0xff]
    %v2314 = vld [vmem:[#allocation6 + $0x2b8] sm:$0xff]
    %v2315 = vld [vmem:[#allocation6 + $0x2c0] sm:$0xff]
    %v2316 = vld [vmem:[#allocation6 + $0x2c8] sm:$0xff]
    %v2317 = vld [vmem:[#allocation6 + $0x2d0] sm:$0xff]
    %v2318 = vld [vmem:[#allocation6 + $0x2d8] sm:$0xff]
    %v2319 = vld [vmem:[#allocation6 + $0x2e0] sm:$0xff]
    %v2320 = vld [vmem:[#allocation6 + $0x2e8] sm:$0xff]
    %v2321 = vld [vmem:[#allocation6 + $0x2f0] sm:$0xff]
    %v2322 = vld [vmem:[#allocation6 + $0x2f8] sm:$0xff]
    %v2323 = vld [vmem:[#allocation6 + $0x300] sm:$0xff]
    %v2324 = vld [vmem:[#allocation6 + $0x308] sm:$0xff]
    %v2325 = vld [vmem:[#allocation6 + $0x310] sm:$0xff]
    %v2326 = vld [vmem:[#allocation6 + $0x318] sm:$0xff]
    %v2327 = vld [vmem:[#allocation6 + $0x320] sm:$0xff]
    %v2328 = vld [vmem:[#allocation6 + $0x328] sm:$0xff]
    %v2329 = vld [vmem:[#allocation6 + $0x330] sm:$0xff]
    %v2330 = vld [vmem:[#allocation6 + $0x338] sm:$0xff]
    %v2331 = vld [vmem:[#allocation6 + $0x340] sm:$0xff]
    %v2332 = vld [vmem:[#allocation6 + $0x348] sm:$0xff]
    %v2333 = vld [vmem:[#allocation6 + $0x350] sm:$0xff]
    %v2334 = vld [vmem:[#allocation6 + $0x358] sm:$0xff]
    %v2335 = vld [vmem:[#allocation6 + $0x360] sm:$0xff]
    %v2336 = vld [vmem:[#allocation6 + $0x368] sm:$0xff]
    %v2337 = vld [vmem:[#allocation6 + $0x370] sm:$0xff]
    %v2338 = vld [vmem:[#allocation6 + $0x378] sm:$0xff]
    %v2339 = vld [vmem:[#allocation6 + $0x380] sm:$0xff]
    %v2340 = vld [vmem:[#allocation6 + $0x388] sm:$0xff]
    %v2341 = vld [vmem:[#allocation6 + $0x390] sm:$0xff]
    %v2342 = vld [vmem:[#allocation6 + $0x398] sm:$0xff]
    %v2343 = vld [vmem:[#allocation6 + $0x3a0] sm:$0xff]
    %v2344 = vld [vmem:[#allocation6 + $0x3a8] sm:$0xff]
    %v2345 = vld [vmem:[#allocation6 + $0x3b0] sm:$0xff]
    %v2346 = vld [vmem:[#allocation6 + $0x3b8] sm:$0xff]
    %v2347 = vld [vmem:[#allocation6 + $0x3c0] sm:$0xff]
    %v2348 = vld [vmem:[#allocation6 + $0x3c8] sm:$0xff]
    %v2349 = vld [vmem:[#allocation6 + $0x3d0] sm:$0xff]
    %v2350 = vld [vmem:[#allocation6 + $0x3d8] sm:$0xff]
    %v2351 = vld [vmem:[#allocation6 + $0x3e0] sm:$0xff]
    %v2352 = vld [vmem:[#allocation6 + $0x3e8] sm:$0xff]
    %v2353 = vld [vmem:[#allocation6 + $0x3f0] sm:$0xff]
    %v2354 = vld [vmem:[#allocation6 + $0x3f8] sm:$0xff]
    %v2355 = vld [vmem:[%s8] sm:$0xf]
    %v2357 = vperm.slane %v2355, 0
    %v2358 = vperm.slane %v2355, 1
    %v2359 = vperm.slane %v2355, 2
    %v2360 = vperm.slane %v2355, 3
    %v2493 = vunpack.c.l.b16 %v2227
    %v2494 = vunpack.c.h.b16 %v2227
    %v2495 = vunpack.c.l.b16 %v2228
    %v2496 = vunpack.c.h.b16 %v2228
    %v2497 = vunpack.c.l.b16 %v2229
    %v2498 = vunpack.c.h.b16 %v2229
    %v2499 = vunpack.c.l.b16 %v2230
    %v2500 = vunpack.c.h.b16 %v2230
    %v2501 = vunpack.c.l.b16 %v2231
    %v2502 = vunpack.c.h.b16 %v2231
    %v2503 = vunpack.c.l.b16 %v2232
    %v2504 = vunpack.c.h.b16 %v2232
    %v2505 = vunpack.c.l.b16 %v2233
    %v2506 = vunpack.c.h.b16 %v2233
    %v2507 = vunpack.c.l.b16 %v2234
    %v2508 = vunpack.c.h.b16 %v2234
    %v2509 = vunpack.c.l.b16 %v2235
    %v2510 = vunpack.c.h.b16 %v2235
    %v2511 = vunpack.c.l.b16 %v2236
    %v2512 = vunpack.c.h.b16 %v2236
    %v2513 = vunpack.c.l.b16 %v2237
    %v2514 = vunpack.c.h.b16 %v2237
    %v2515 = vunpack.c.l.b16 %v2238
    %v2516 = vunpack.c.h.b16 %v2238
    %v2517 = vunpack.c.l.b16 %v2239
    %v2518 = vunpack.c.h.b16 %v2239
    %v2519 = vunpack.c.l.b16 %v2240
    %v2520 = vunpack.c.h.b16 %v2240
    %v2521 = vunpack.c.l.b16 %v2241
    %v2522 = vunpack.c.h.b16 %v2241
    %v2523 = vunpack.c.l.b16 %v2242
    %v2524 = vunpack.c.h.b16 %v2242
    %v2525 = vunpack.c.l.b16 %v2243
    %v2526 = vunpack.c.h.b16 %v2243
    %v2527 = vunpack.c.l.b16 %v2244
    %v2528 = vunpack.c.h.b16 %v2244
    %v2529 = vunpack.c.l.b16 %v2245
    %v2530 = vunpack.c.h.b16 %v2245
    %v2531 = vunpack.c.l.b16 %v2246
    %v2532 = vunpack.c.h.b16 %v2246
    %v2533 = vunpack.c.l.b16 %v2247
    %v2534 = vunpack.c.h.b16 %v2247
    %v2535 = vunpack.c.l.b16 %v2248
    %v2536 = vunpack.c.h.b16 %v2248
    %v2537 = vunpack.c.l.b16 %v2249
    %v2538 = vunpack.c.h.b16 %v2249
    %v2539 = vunpack.c.l.b16 %v2250
    %v2540 = vunpack.c.h.b16 %v2250
    %v2541 = vunpack.c.l.b16 %v2251
    %v2542 = vunpack.c.h.b16 %v2251
    %v2543 = vunpack.c.l.b16 %v2252
    %v2544 = vunpack.c.h.b16 %v2252
    %v2545 = vunpack.c.l.b16 %v2253
    %v2546 = vunpack.c.h.b16 %v2253
    %v2547 = vunpack.c.l.b16 %v2254
    %v2548 = vunpack.c.h.b16 %v2254
    %v2549 = vunpack.c.l.b16 %v2255
    %v2550 = vunpack.c.h.b16 %v2255
    %v2551 = vunpack.c.l.b16 %v2256
    %v2552 = vunpack.c.h.b16 %v2256
    %v2553 = vunpack.c.l.b16 %v2257
    %v2554 = vunpack.c.h.b16 %v2257
    %v2555 = vunpack.c.l.b16 %v2258
    %v2556 = vunpack.c.h.b16 %v2258
    %v2557 = vunpack.c.l.b16 %v2259
    %v2558 = vunpack.c.h.b16 %v2259
    %v2559 = vunpack.c.l.b16 %v2260
    %v2560 = vunpack.c.h.b16 %v2260
    %v2561 = vunpack.c.l.b16 %v2261
    %v2562 = vunpack.c.h.b16 %v2261
    %v2563 = vunpack.c.l.b16 %v2262
    %v2564 = vunpack.c.h.b16 %v2262
    %v2565 = vunpack.c.l.b16 %v2263
    %v2566 = vunpack.c.h.b16 %v2263
    %v2567 = vunpack.c.l.b16 %v2264
    %v2568 = vunpack.c.h.b16 %v2264
    %v2569 = vunpack.c.l.b16 %v2265
    %v2570 = vunpack.c.h.b16 %v2265
    %v2571 = vunpack.c.l.b16 %v2266
    %v2572 = vunpack.c.h.b16 %v2266
    %v2573 = vunpack.c.l.b16 %v2267
    %v2574 = vunpack.c.h.b16 %v2267
    %v2575 = vunpack.c.l.b16 %v2268
    %v2576 = vunpack.c.h.b16 %v2268
    %v2577 = vunpack.c.l.b16 %v2269
    %v2578 = vunpack.c.h.b16 %v2269
    %v2579 = vunpack.c.l.b16 %v2270
    %v2580 = vunpack.c.h.b16 %v2270
    %v2581 = vunpack.c.l.b16 %v2271
    %v2582 = vunpack.c.h.b16 %v2271
    %v2583 = vunpack.c.l.b16 %v2272
    %v2584 = vunpack.c.h.b16 %v2272
    %v2585 = vunpack.c.l.b16 %v2273
    %v2586 = vunpack.c.h.b16 %v2273
    %v2587 = vunpack.c.l.b16 %v2274
    %v2588 = vunpack.c.h.b16 %v2274
    %v2589 = vunpack.c.l.b16 %v2275
    %v2590 = vunpack.c.h.b16 %v2275
    %v2591 = vunpack.c.l.b16 %v2276
    %v2592 = vunpack.c.h.b16 %v2276
    %v2593 = vunpack.c.l.b16 %v2277
    %v2594 = vunpack.c.h.b16 %v2277
    %v2595 = vunpack.c.l.b16 %v2278
    %v2596 = vunpack.c.h.b16 %v2278
    %v2597 = vunpack.c.l.b16 %v2279
    %v2598 = vunpack.c.h.b16 %v2279
    %v2599 = vunpack.c.l.b16 %v2280
    %v2600 = vunpack.c.h.b16 %v2280
    %v2601 = vunpack.c.l.b16 %v2281
    %v2602 = vunpack.c.h.b16 %v2281
    %v2603 = vunpack.c.l.b16 %v2282
    %v2604 = vunpack.c.h.b16 %v2282
    %v2605 = vunpack.c.l.b16 %v2283
    %v2606 = vunpack.c.h.b16 %v2283
    %v2607 = vunpack.c.l.b16 %v2284
    %v2608 = vunpack.c.h.b16 %v2284
    %v2609 = vunpack.c.l.b16 %v2285
    %v2610 = vunpack.c.h.b16 %v2285
    %v2611 = vunpack.c.l.b16 %v2286
    %v2612 = vunpack.c.h.b16 %v2286
    %v2613 = vunpack.c.l.b16 %v2287
    %v2614 = vunpack.c.h.b16 %v2287
    %v2615 = vunpack.c.l.b16 %v2288
    %v2616 = vunpack.c.h.b16 %v2288
    %v2617 = vunpack.c.l.b16 %v2289
    %v2618 = vunpack.c.h.b16 %v2289
    %v2619 = vunpack.c.l.b16 %v2290
    %v2620 = vunpack.c.h.b16 %v2290
    %v2621 = vunpack.c.l.b16 %v2291
    %v2622 = vunpack.c.h.b16 %v2291
    %v2623 = vunpack.c.l.b16 %v2292
    %v2624 = vunpack.c.h.b16 %v2292
    %v2625 = vunpack.c.l.b16 %v2293
    %v2626 = vunpack.c.h.b16 %v2293
    %v2627 = vunpack.c.l.b16 %v2294
    %v2628 = vunpack.c.h.b16 %v2294
    %v2629 = vunpack.c.l.b16 %v2295
    %v2630 = vunpack.c.h.b16 %v2295
    %v2631 = vunpack.c.l.b16 %v2296
    %v2632 = vunpack.c.h.b16 %v2296
    %v2633 = vunpack.c.l.b16 %v2297
    %v2634 = vunpack.c.h.b16 %v2297
    %v2635 = vunpack.c.l.b16 %v2298
    %v2636 = vunpack.c.h.b16 %v2298
    %v2637 = vunpack.c.l.b16 %v2299
    %v2638 = vunpack.c.h.b16 %v2299
    %v2639 = vunpack.c.l.b16 %v2300
    %v2640 = vunpack.c.h.b16 %v2300
    %v2641 = vunpack.c.l.b16 %v2301
    %v2642 = vunpack.c.h.b16 %v2301
    %v2643 = vunpack.c.l.b16 %v2302
    %v2644 = vunpack.c.h.b16 %v2302
    %v2645 = vunpack.c.l.b16 %v2303
    %v2646 = vunpack.c.h.b16 %v2303
    %v2647 = vunpack.c.l.b16 %v2304
    %v2648 = vunpack.c.h.b16 %v2304
    %v2649 = vunpack.c.l.b16 %v2305
    %v2650 = vunpack.c.h.b16 %v2305
    %v2651 = vunpack.c.l.b16 %v2306
    %v2652 = vunpack.c.h.b16 %v2306
    %v2653 = vunpack.c.l.b16 %v2307
    %v2654 = vunpack.c.h.b16 %v2307
    %v2655 = vunpack.c.l.b16 %v2308
    %v2656 = vunpack.c.h.b16 %v2308
    %v2657 = vunpack.c.l.b16 %v2309
    %v2658 = vunpack.c.h.b16 %v2309
    %v2659 = vunpack.c.l.b16 %v2310
    %v2660 = vunpack.c.h.b16 %v2310
    %v2661 = vunpack.c.l.b16 %v2311
    %v2662 = vunpack.c.h.b16 %v2311
    %v2663 = vunpack.c.l.b16 %v2312
    %v2664 = vunpack.c.h.b16 %v2312
    %v2665 = vunpack.c.l.b16 %v2313
    %v2666 = vunpack.c.h.b16 %v2313
    %v2667 = vunpack.c.l.b16 %v2314
    %v2668 = vunpack.c.h.b16 %v2314
    %v2669 = vunpack.c.l.b16 %v2315
    %v2670 = vunpack.c.h.b16 %v2315
    %v2671 = vunpack.c.l.b16 %v2316
    %v2672 = vunpack.c.h.b16 %v2316
    %v2673 = vunpack.c.l.b16 %v2317
    %v2674 = vunpack.c.h.b16 %v2317
    %v2675 = vunpack.c.l.b16 %v2318
    %v2676 = vunpack.c.h.b16 %v2318
    %v2677 = vunpack.c.l.b16 %v2319
    %v2678 = vunpack.c.h.b16 %v2319
    %v2679 = vunpack.c.l.b16 %v2320
    %v2680 = vunpack.c.h.b16 %v2320
    %v2681 = vunpack.c.l.b16 %v2321
    %v2682 = vunpack.c.h.b16 %v2321
    %v2683 = vunpack.c.l.b16 %v2322
    %v2684 = vunpack.c.h.b16 %v2322
    %v2685 = vunpack.c.l.b16 %v2323
    %v2686 = vunpack.c.h.b16 %v2323
    %v2687 = vunpack.c.l.b16 %v2324
    %v2688 = vunpack.c.h.b16 %v2324
    %v2689 = vunpack.c.l.b16 %v2325
    %v2690 = vunpack.c.h.b16 %v2325
    %v2691 = vunpack.c.l.b16 %v2326
    %v2692 = vunpack.c.h.b16 %v2326
    %v2693 = vunpack.c.l.b16 %v2327
    %v2694 = vunpack.c.h.b16 %v2327
    %v2695 = vunpack.c.l.b16 %v2328
    %v2696 = vunpack.c.h.b16 %v2328
    %v2697 = vunpack.c.l.b16 %v2329
    %v2698 = vunpack.c.h.b16 %v2329
    %v2699 = vunpack.c.l.b16 %v2330
    %v2700 = vunpack.c.h.b16 %v2330
    %v2701 = vunpack.c.l.b16 %v2331
    %v2702 = vunpack.c.h.b16 %v2331
    %v2703 = vunpack.c.l.b16 %v2332
    %v2704 = vunpack.c.h.b16 %v2332
    %v2705 = vunpack.c.l.b16 %v2333
    %v2706 = vunpack.c.h.b16 %v2333
    %v2707 = vunpack.c.l.b16 %v2334
    %v2708 = vunpack.c.h.b16 %v2334
    %v2709 = vunpack.c.l.b16 %v2335
    %v2710 = vunpack.c.h.b16 %v2335
    %v2711 = vunpack.c.l.b16 %v2336
    %v2712 = vunpack.c.h.b16 %v2336
    %v2713 = vunpack.c.l.b16 %v2337
    %v2714 = vunpack.c.h.b16 %v2337
    %v2715 = vunpack.c.l.b16 %v2338
    %v2716 = vunpack.c.h.b16 %v2338
    %v2717 = vunpack.c.l.b16 %v2339
    %v2718 = vunpack.c.h.b16 %v2339
    %v2719 = vunpack.c.l.b16 %v2340
    %v2720 = vunpack.c.h.b16 %v2340
    %v2721 = vunpack.c.l.b16 %v2341
    %v2722 = vunpack.c.h.b16 %v2341
    %v2723 = vunpack.c.l.b16 %v2342
    %v2724 = vunpack.c.h.b16 %v2342
    %v2725 = vunpack.c.l.b16 %v2343
    %v2726 = vunpack.c.h.b16 %v2343
    %v2727 = vunpack.c.l.b16 %v2344
    %v2728 = vunpack.c.h.b16 %v2344
    %v2729 = vunpack.c.l.b16 %v2345
    %v2730 = vunpack.c.h.b16 %v2345
    %v2731 = vunpack.c.l.b16 %v2346
    %v2732 = vunpack.c.h.b16 %v2346
    %v2733 = vunpack.c.l.b16 %v2347
    %v2734 = vunpack.c.h.b16 %v2347
    %v2735 = vunpack.c.l.b16 %v2348
    %v2736 = vunpack.c.h.b16 %v2348
    %v2737 = vunpack.c.l.b16 %v2349
    %v2738 = vunpack.c.h.b16 %v2349
    %v2739 = vunpack.c.l.b16 %v2350
    %v2740 = vunpack.c.h.b16 %v2350
    %v2741 = vunpack.c.l.b16 %v2351
    %v2742 = vunpack.c.h.b16 %v2351
    %v2743 = vunpack.c.l.b16 %v2352
    %v2744 = vunpack.c.h.b16 %v2352
    %v2745 = vunpack.c.l.b16 %v2353
    %v2746 = vunpack.c.h.b16 %v2353
    %v2747 = vunpack.c.l.b16 %v2354
    %v2748 = vunpack.c.h.b16 %v2354
    %v2749 = vpack.c.b16 %v2497, %v2493
    %v2750 = vpack.c.b16 %v2498, %v2494
    %v2751 = vpack.c.b16 %v2499, %v2495
    %v2752 = vpack.c.b16 %v2500, %v2496
    %v2753 = vpack.c.b16 %v2505, %v2501
    %v2754 = vpack.c.b16 %v2506, %v2502
    %v2755 = vpack.c.b16 %v2507, %v2503
    %v2756 = vpack.c.b16 %v2508, %v2504
    %v2757 = vpack.c.b16 %v2513, %v2509
    %v2758 = vpack.c.b16 %v2514, %v2510
    %v2759 = vpack.c.b16 %v2515, %v2511
    %v2760 = vpack.c.b16 %v2516, %v2512
    %v2761 = vpack.c.b16 %v2521, %v2517
    %v2762 = vpack.c.b16 %v2522, %v2518
    %v2763 = vpack.c.b16 %v2523, %v2519
    %v2764 = vpack.c.b16 %v2524, %v2520
    %v2765 = vpack.c.b16 %v2529, %v2525
    %v2766 = vpack.c.b16 %v2530, %v2526
    %v2767 = vpack.c.b16 %v2531, %v2527
    %v2768 = vpack.c.b16 %v2532, %v2528
    %v2769 = vpack.c.b16 %v2537, %v2533
    %v2770 = vpack.c.b16 %v2538, %v2534
    %v2771 = vpack.c.b16 %v2539, %v2535
    %v2772 = vpack.c.b16 %v2540, %v2536
    %v2773 = vpack.c.b16 %v2545, %v2541
    %v2774 = vpack.c.b16 %v2546, %v2542
    %v2775 = vpack.c.b16 %v2547, %v2543
    %v2776 = vpack.c.b16 %v2548, %v2544
    %v2777 = vpack.c.b16 %v2553, %v2549
    %v2778 = vpack.c.b16 %v2554, %v2550
    %v2779 = vpack.c.b16 %v2555, %v2551
    %v2780 = vpack.c.b16 %v2556, %v2552
    %v2781 = vpack.c.b16 %v2561, %v2557
    %v2782 = vpack.c.b16 %v2562, %v2558
    %v2783 = vpack.c.b16 %v2563, %v2559
    %v2784 = vpack.c.b16 %v2564, %v2560
    %v2785 = vpack.c.b16 %v2569, %v2565
    %v2786 = vpack.c.b16 %v2570, %v2566
    %v2787 = vpack.c.b16 %v2571, %v2567
    %v2788 = vpack.c.b16 %v2572, %v2568
    %v2789 = vpack.c.b16 %v2577, %v2573
    %v2790 = vpack.c.b16 %v2578, %v2574
    %v2791 = vpack.c.b16 %v2579, %v2575
    %v2792 = vpack.c.b16 %v2580, %v2576
    %v2793 = vpack.c.b16 %v2585, %v2581
    %v2794 = vpack.c.b16 %v2586, %v2582
    %v2795 = vpack.c.b16 %v2587, %v2583
    %v2796 = vpack.c.b16 %v2588, %v2584
    %v2797 = vpack.c.b16 %v2593, %v2589
    %v2798 = vpack.c.b16 %v2594, %v2590
    %v2799 = vpack.c.b16 %v2595, %v2591
    %v2800 = vpack.c.b16 %v2596, %v2592
    %v2801 = vpack.c.b16 %v2601, %v2597
    %v2802 = vpack.c.b16 %v2602, %v2598
    %v2803 = vpack.c.b16 %v2603, %v2599
    %v2804 = vpack.c.b16 %v2604, %v2600
    %v2805 = vpack.c.b16 %v2609, %v2605
    %v2806 = vpack.c.b16 %v2610, %v2606
    %v2807 = vpack.c.b16 %v2611, %v2607
    %v2808 = vpack.c.b16 %v2612, %v2608
    %v2809 = vpack.c.b16 %v2617, %v2613
    %v2810 = vpack.c.b16 %v2618, %v2614
    %v2811 = vpack.c.b16 %v2619, %v2615
    %v2812 = vpack.c.b16 %v2620, %v2616
    %v2813 = vpack.c.b16 %v2625, %v2621
    %v2814 = vpack.c.b16 %v2626, %v2622
    %v2815 = vpack.c.b16 %v2627, %v2623
    %v2816 = vpack.c.b16 %v2628, %v2624
    %v2817 = vpack.c.b16 %v2633, %v2629
    %v2818 = vpack.c.b16 %v2634, %v2630
    %v2819 = vpack.c.b16 %v2635, %v2631
    %v2820 = vpack.c.b16 %v2636, %v2632
    %v2821 = vpack.c.b16 %v2641, %v2637
    %v2822 = vpack.c.b16 %v2642, %v2638
    %v2823 = vpack.c.b16 %v2643, %v2639
    %v2824 = vpack.c.b16 %v2644, %v2640
    %v2825 = vpack.c.b16 %v2649, %v2645
    %v2826 = vpack.c.b16 %v2650, %v2646
    %v2827 = vpack.c.b16 %v2651, %v2647
    %v2828 = vpack.c.b16 %v2652, %v2648
    %v2829 = vpack.c.b16 %v2657, %v2653
    %v2830 = vpack.c.b16 %v2658, %v2654
    %v2831 = vpack.c.b16 %v2659, %v2655
    %v2832 = vpack.c.b16 %v2660, %v2656
    %v2833 = vpack.c.b16 %v2665, %v2661
    %v2834 = vpack.c.b16 %v2666, %v2662
    %v2835 = vpack.c.b16 %v2667, %v2663
    %v2836 = vpack.c.b16 %v2668, %v2664
    %v2837 = vpack.c.b16 %v2673, %v2669
    %v2838 = vpack.c.b16 %v2674, %v2670
    %v2839 = vpack.c.b16 %v2675, %v2671
    %v2840 = vpack.c.b16 %v2676, %v2672
    %v2841 = vpack.c.b16 %v2681, %v2677
    %v2842 = vpack.c.b16 %v2682, %v2678
    %v2843 = vpack.c.b16 %v2683, %v2679
    %v2844 = vpack.c.b16 %v2684, %v2680
    %v2845 = vpack.c.b16 %v2689, %v2685
    %v2846 = vpack.c.b16 %v2690, %v2686
    %v2847 = vpack.c.b16 %v2691, %v2687
    %v2848 = vpack.c.b16 %v2692, %v2688
    %v2849 = vpack.c.b16 %v2697, %v2693
    %v2850 = vpack.c.b16 %v2698, %v2694
    %v2851 = vpack.c.b16 %v2699, %v2695
    %v2852 = vpack.c.b16 %v2700, %v2696
    %v2853 = vpack.c.b16 %v2705, %v2701
    %v2854 = vpack.c.b16 %v2706, %v2702
    %v2855 = vpack.c.b16 %v2707, %v2703
    %v2856 = vpack.c.b16 %v2708, %v2704
    %v2857 = vpack.c.b16 %v2713, %v2709
    %v2858 = vpack.c.b16 %v2714, %v2710
    %v2859 = vpack.c.b16 %v2715, %v2711
    %v2860 = vpack.c.b16 %v2716, %v2712
    %v2861 = vpack.c.b16 %v2721, %v2717
    %v2862 = vpack.c.b16 %v2722, %v2718
    %v2863 = vpack.c.b16 %v2723, %v2719
    %v2864 = vpack.c.b16 %v2724, %v2720
    %v2865 = vpack.c.b16 %v2729, %v2725
    %v2866 = vpack.c.b16 %v2730, %v2726
    %v2867 = vpack.c.b16 %v2731, %v2727
    %v2868 = vpack.c.b16 %v2732, %v2728
    %v2869 = vpack.c.b16 %v2737, %v2733
    %v2870 = vpack.c.b16 %v2738, %v2734
    %v2871 = vpack.c.b16 %v2739, %v2735
    %v2872 = vpack.c.b16 %v2740, %v2736
    %v2873 = vpack.c.b16 %v2745, %v2741
    %v2874 = vpack.c.b16 %v2746, %v2742
    %v2875 = vpack.c.b16 %v2747, %v2743
    %v2876 = vpack.c.b16 %v2748, %v2744
    %3005 = vmatpush.bf16.msra.mxu0 %v2777
    %3006 = vmatpush.bf16.msra.mxu0 %v2773
    %3007 = vmatpush.bf16.msra.mxu0 %v2769
    %3008 = vmatpush.bf16.msra.mxu0 %v2765
    %3009 = vmatpush.bf16.msra.mxu0 %v2761
    %3010 = vmatpush.bf16.msra.mxu0 %v2757
    %3011 = vmatpush.bf16.msra.mxu0 %v2753
    %3012 = vmatpush.bf16.msra.mxu0 %v2749
    %3013 = vmatmul.bf16.gmra.mxu0 %v2223
    %v3014 = vpop.f32.mrf.mxu0
    %v3015 = vadd.f32 %v2357, %v3014
    %v3016 = vpop.f32.mrf.mxu0
    %v3017 = vadd.f32 %v2357, %v3016
    %3018 = vdwg.mxu0
    %3019 = vmatpush.bf16.msra.mxu0 %v2809
    %3020 = vmatpush.bf16.msra.mxu0 %v2805
    %3021 = vmatpush.bf16.msra.mxu0 %v2801
    %3022 = vmatpush.bf16.msra.mxu0 %v2797
    %3023 = vmatpush.bf16.msra.mxu0 %v2793
    %3024 = vmatpush.bf16.msra.mxu0 %v2789
    %3025 = vmatpush.bf16.msra.mxu0 %v2785
    %3026 = vmatpush.bf16.msra.mxu0 %v2781
    %3027 = vmatmul.bf16.gmra.mxu0 %v2224
    %v3028 = vpop.f32.mrf.mxu0
    %v3029 = vadd.f32 %v3015, %v3028
    %v3030 = vpop.f32.mrf.mxu0
    %v3031 = vadd.f32 %v3017, %v3030
    %3032 = vdwg.mxu0
    %3033 = vmatpush.bf16.msra.mxu0 %v2841
    %3034 = vmatpush.bf16.msra.mxu0 %v2837
    %3035 = vmatpush.bf16.msra.mxu0 %v2833
    %3036 = vmatpush.bf16.msra.mxu0 %v2829
    %3037 = vmatpush.bf16.msra.mxu0 %v2825
    %3038 = vmatpush.bf16.msra.mxu0 %v2821
    %3039 = vmatpush.bf16.msra.mxu0 %v2817
    %3040 = vmatpush.bf16.msra.mxu0 %v2813
    %3041 = vmatmul.bf16.gmra.mxu0 %v2225
    %v3042 = vpop.f32.mrf.mxu0
    %v3043 = vadd.f32 %v3029, %v3042
    %v3044 = vpop.f32.mrf.mxu0
    %v3045 = vadd.f32 %v3031, %v3044
    %3046 = vdwg.mxu0
    %3047 = vmatpush.bf16.msra.mxu0 %v2873
    %3048 = vmatpush.bf16.msra.mxu0 %v2869
    %3049 = vmatpush.bf16.msra.mxu0 %v2865
    %3050 = vmatpush.bf16.msra.mxu0 %v2861
    %3051 = vmatpush.bf16.msra.mxu0 %v2857
    %3052 = vmatpush.bf16.msra.mxu0 %v2853
    %3053 = vmatpush.bf16.msra.mxu0 %v2849
    %3054 = vmatpush.bf16.msra.mxu0 %v2845
    %3055 = vmatmul.bf16.gmra.mxu0 %v2226
    %v3056 = vpop.f32.mrf.mxu0
    %v3057 = vadd.f32 %v3043, %v3056
    %v3058 = vpop.f32.mrf.mxu0
    %v3059 = vadd.f32 %v3045, %v3058
    %3060 = vdwg.mxu0
    %3061 = vmatpush.bf16.msra.mxu0 %v2778
    %3062 = vmatpush.bf16.msra.mxu0 %v2774
    %3063 = vmatpush.bf16.msra.mxu0 %v2770
    %3064 = vmatpush.bf16.msra.mxu0 %v2766
    %3065 = vmatpush.bf16.msra.mxu0 %v2762
    %3066 = vmatpush.bf16.msra.mxu0 %v2758
    %3067 = vmatpush.bf16.msra.mxu0 %v2754
    %3068 = vmatpush.bf16.msra.mxu0 %v2750
    %3069 = vmatmul.bf16.gmra.mxu0 %v2223
    %v3070 = vpop.f32.mrf.mxu0
    %v3071 = vadd.f32 %v2358, %v3070
    %v3072 = vpop.f32.mrf.mxu0
    %v3073 = vadd.f32 %v2358, %v3072
    %3074 = vdwg.mxu0
    %3075 = vmatpush.bf16.msra.mxu0 %v2810
    %3076 = vmatpush.bf16.msra.mxu0 %v2806
    %3077 = vmatpush.bf16.msra.mxu0 %v2802
    %3078 = vmatpush.bf16.msra.mxu0 %v2798
    %3079 = vmatpush.bf16.msra.mxu0 %v2794
    %3080 = vmatpush.bf16.msra.mxu0 %v2790
    %3081 = vmatpush.bf16.msra.mxu0 %v2786
    %3082 = vmatpush.bf16.msra.mxu0 %v2782
    %3083 = vmatmul.bf16.gmra.mxu0 %v2224
    %v3084 = vpop.f32.mrf.mxu0
    %v3085 = vadd.f32 %v3071, %v3084
    %v3086 = vpop.f32.mrf.mxu0
    %v3087 = vadd.f32 %v3073, %v3086
    %3088 = vdwg.mxu0
    %3089 = vmatpush.bf16.msra.mxu0 %v2842
    %3090 = vmatpush.bf16.msra.mxu0 %v2838
    %3091 = vmatpush.bf16.msra.mxu0 %v2834
    %3092 = vmatpush.bf16.msra.mxu0 %v2830
    %3093 = vmatpush.bf16.msra.mxu0 %v2826
    %3094 = vmatpush.bf16.msra.mxu0 %v2822
    %3095 = vmatpush.bf16.msra.mxu0 %v2818
    %3096 = vmatpush.bf16.msra.mxu0 %v2814
    %3097 = vmatmul.bf16.gmra.mxu0 %v2225
    %v3098 = vpop.f32.mrf.mxu0
    %v3099 = vadd.f32 %v3085, %v3098
    %v3100 = vpop.f32.mrf.mxu0
    %v3101 = vadd.f32 %v3087, %v3100
    %3102 = vdwg.mxu0
    %3103 = vmatpush.bf16.msra.mxu0 %v2874
    %3104 = vmatpush.bf16.msra.mxu0 %v2870
    %3105 = vmatpush.bf16.msra.mxu0 %v2866
    %3106 = vmatpush.bf16.msra.mxu0 %v2862
    %3107 = vmatpush.bf16.msra.mxu0 %v2858
    %3108 = vmatpush.bf16.msra.mxu0 %v2854
    %3109 = vmatpush.bf16.msra.mxu0 %v2850
    %3110 = vmatpush.bf16.msra.mxu0 %v2846
    %3111 = vmatmul.bf16.gmra.mxu0 %v2226
    %v3112 = vpop.f32.mrf.mxu0
    %v3113 = vadd.f32 %v3099, %v3112
    %v3114 = vpop.f32.mrf.mxu0
    %v3115 = vadd.f32 %v3101, %v3114
    %3116 = vdwg.mxu0
    %3117 = vmatpush.bf16.msra.mxu0 %v2779
    %3118 = vmatpush.bf16.msra.mxu0 %v2775
    %3119 = vmatpush.bf16.msra.mxu0 %v2771
    %3120 = vmatpush.bf16.msra.mxu0 %v2767
    %3121 = vmatpush.bf16.msra.mxu0 %v2763
    %3122 = vmatpush.bf16.msra.mxu0 %v2759
    %3123 = vmatpush.bf16.msra.mxu0 %v2755
    %3124 = vmatpush.bf16.msra.mxu0 %v2751
    %3125 = vmatmul.bf16.gmra.mxu0 %v2223
    %v3126 = vpop.f32.mrf.mxu0
    %v3127 = vadd.f32 %v2359, %v3126
    %v3128 = vpop.f32.mrf.mxu0
    %v3129 = vadd.f32 %v2359, %v3128
    %3130 = vdwg.mxu0
    %3131 = vmatpush.bf16.msra.mxu0 %v2811
    %3132 = vmatpush.bf16.msra.mxu0 %v2807
    %3133 = vmatpush.bf16.msra.mxu0 %v2803
    %3134 = vmatpush.bf16.msra.mxu0 %v2799
    %3135 = vmatpush.bf16.msra.mxu0 %v2795
    %3136 = vmatpush.bf16.msra.mxu0 %v2791
    %3137 = vmatpush.bf16.msra.mxu0 %v2787
    %3138 = vmatpush.bf16.msra.mxu0 %v2783
    %3139 = vmatmul.bf16.gmra.mxu0 %v2224
    %v3140 = vpop.f32.mrf.mxu0
    %v3141 = vadd.f32 %v3127, %v3140
    %v3142 = vpop.f32.mrf.mxu0
    %v3143 = vadd.f32 %v3129, %v3142
    %3144 = vdwg.mxu0
    %3145 = vmatpush.bf16.msra.mxu0 %v2843
    %3146 = vmatpush.bf16.msra.mxu0 %v2839
    %3147 = vmatpush.bf16.msra.mxu0 %v2835
    %3148 = vmatpush.bf16.msra.mxu0 %v2831
    %3149 = vmatpush.bf16.msra.mxu0 %v2827
    %3150 = vmatpush.bf16.msra.mxu0 %v2823
    %3151 = vmatpush.bf16.msra.mxu0 %v2819
    %3152 = vmatpush.bf16.msra.mxu0 %v2815
    %3153 = vmatmul.bf16.gmra.mxu0 %v2225
    %v3154 = vpop.f32.mrf.mxu0
    %v3155 = vadd.f32 %v3141, %v3154
    %v3156 = vpop.f32.mrf.mxu0
    %v3157 = vadd.f32 %v3143, %v3156
    %3158 = vdwg.mxu0
    %3159 = vmatpush.bf16.msra.mxu0 %v2875
    %3160 = vmatpush.bf16.msra.mxu0 %v2871
    %3161 = vmatpush.bf16.msra.mxu0 %v2867
    %3162 = vmatpush.bf16.msra.mxu0 %v2863
    %3163 = vmatpush.bf16.msra.mxu0 %v2859
    %3164 = vmatpush.bf16.msra.mxu0 %v2855
    %3165 = vmatpush.bf16.msra.mxu0 %v2851
    %3166 = vmatpush.bf16.msra.mxu0 %v2847
    %3167 = vmatmul.bf16.gmra.mxu0 %v2226
    %v3168 = vpop.f32.mrf.mxu0
    %v3169 = vadd.f32 %v3155, %v3168
    %v3170 = vpop.f32.mrf.mxu0
    %v3171 = vadd.f32 %v3157, %v3170
    %3172 = vdwg.mxu0
    %3173 = vmatpush.bf16.msra.mxu0 %v2780
    %3174 = vmatpush.bf16.msra.mxu0 %v2776
    %3175 = vmatpush.bf16.msra.mxu0 %v2772
    %3176 = vmatpush.bf16.msra.mxu0 %v2768
    %3177 = vmatpush.bf16.msra.mxu0 %v2764
    %3178 = vmatpush.bf16.msra.mxu0 %v2760
    %3179 = vmatpush.bf16.msra.mxu0 %v2756
    %3180 = vmatpush.bf16.msra.mxu0 %v2752
    %3181 = vmatmul.bf16.gmra.mxu0 %v2223
    %v3182 = vpop.f32.mrf.mxu0
    %v3183 = vadd.f32 %v2360, %v3182
    %v3184 = vpop.f32.mrf.mxu0
    %v3185 = vadd.f32 %v2360, %v3184
    %3186 = vdwg.mxu0
    %3187 = vmatpush.bf16.msra.mxu0 %v2812
    %3188 = vmatpush.bf16.msra.mxu0 %v2808
    %3189 = vmatpush.bf16.msra.mxu0 %v2804
    %3190 = vmatpush.bf16.msra.mxu0 %v2800
    %3191 = vmatpush.bf16.msra.mxu0 %v2796
    %3192 = vmatpush.bf16.msra.mxu0 %v2792
    %3193 = vmatpush.bf16.msra.mxu0 %v2788
    %3194 = vmatpush.bf16.msra.mxu0 %v2784
    %3195 = vmatmul.bf16.gmra.mxu0 %v2224
    %v3196 = vpop.f32.mrf.mxu0
    %v3197 = vadd.f32 %v3183, %v3196
    %v3198 = vpop.f32.mrf.mxu0
    %v3199 = vadd.f32 %v3185, %v3198
    %3200 = vdwg.mxu0
    %3201 = vmatpush.bf16.msra.mxu0 %v2844
    %3202 = vmatpush.bf16.msra.mxu0 %v2840
    %3203 = vmatpush.bf16.msra.mxu0 %v2836
    %3204 = vmatpush.bf16.msra.mxu0 %v2832
    %3205 = vmatpush.bf16.msra.mxu0 %v2828
    %3206 = vmatpush.bf16.msra.mxu0 %v2824
    %3207 = vmatpush.bf16.msra.mxu0 %v2820
    %3208 = vmatpush.bf16.msra.mxu0 %v2816
    %3209 = vmatmul.bf16.gmra.mxu0 %v2225
    %v3210 = vpop.f32.mrf.mxu0
    %v3211 = vadd.f32 %v3197, %v3210
    %v3212 = vpop.f32.mrf.mxu0
    %v3213 = vadd.f32 %v3199, %v3212
    %3214 = vdwg.mxu0
    %3215 = vmatpush.bf16.msra.mxu0 %v2876
    %3216 = vmatpush.bf16.msra.mxu0 %v2872
    %3217 = vmatpush.bf16.msra.mxu0 %v2868
    %3218 = vmatpush.bf16.msra.mxu0 %v2864
    %3219 = vmatpush.bf16.msra.mxu0 %v2860
    %3220 = vmatpush.bf16.msra.mxu0 %v2856
    %3221 = vmatpush.bf16.msra.mxu0 %v2852
    %3222 = vmatpush.bf16.msra.mxu0 %v2848
    %3223 = vmatmul.bf16.gmra.mxu0 %v2226
    %v3224 = vpop.f32.mrf.mxu0
    %v3225 = vadd.f32 %v3211, %v3224
    %v3226 = vpop.f32.mrf.mxu0
    %v3227 = vadd.f32 %v3213, %v3226
    %3228 = vdwg.mxu0
    %v3229 = vmax.f32 %v3057, 0.0
    %v3230 = vmax.f32 %v3113, 0.0
    %v3231 = vmax.f32 %v3169, 0.0
    %v3232 = vmax.f32 %v3225, 0.0
    %v3233 = vmax.f32 %v3059, 0.0
    %v3234 = vmax.f32 %v3115, 0.0
    %v3235 = vmax.f32 %v3171, 0.0
    %v3236 = vmax.f32 %v3227, 0.0
    %v3237 = vpack.c.bf16 %v3233, %v3229
    %v3238 = vpack.c.bf16 %v3234, %v3230
    %v3239 = vpack.c.bf16 %v3235, %v3231
    %v3240 = vpack.c.bf16 %v3236, %v3232
    %v3241 = vld [vmem:[%s9] sm:$0xf]
    %v3242 = vld [vmem:[%s9 + $0x4] sm:$0xf]
    %v3243 = vld [vmem:[%s9 + $0x8] sm:$0xf]
    %v3244 = vld [vmem:[%s9 + $0xc] sm:$0xf]
    %v3245 = vld [vmem:[%s9 + $0x10] sm:$0xf]
    %v3246 = vld [vmem:[%s9 + $0x14] sm:$0xf]
    %v3247 = vld [vmem:[%s9 + $0x18] sm:$0xf]
    %v3248 = vld [vmem:[%s9 + $0x1c] sm:$0xf]
    %v3249 = vld [vmem:[%s9 + $0x20] sm:$0xf]
    %v3250 = vld [vmem:[%s9 + $0x24] sm:$0xf]
    %v3251 = vld [vmem:[%s9 + $0x28] sm:$0xf]
    %v3252 = vld [vmem:[%s9 + $0x2c] sm:$0xf]
    %v3253 = vld [vmem:[%s9 + $0x30] sm:$0xf]
    %v3254 = vld [vmem:[%s9 + $0x34] sm:$0xf]
    %v3255 = vld [vmem:[%s9 + $0x38] sm:$0xf]
    %v3256 = vld [vmem:[%s9 + $0x3c] sm:$0xf]
    %v3257 = vld [vmem:[%s9 + $0x40] sm:$0xf]
    %v3258 = vld [vmem:[%s9 + $0x44] sm:$0xf]
    %v3259 = vld [vmem:[%s9 + $0x48] sm:$0xf]
    %v3260 = vld [vmem:[%s9 + $0x4c] sm:$0xf]
    %v3261 = vld [vmem:[%s9 + $0x50] sm:$0xf]
    %v3262 = vld [vmem:[%s9 + $0x54] sm:$0xf]
    %v3263 = vld [vmem:[%s9 + $0x58] sm:$0xf]
    %v3264 = vld [vmem:[%s9 + $0x5c] sm:$0xf]
    %v3265 = vld [vmem:[%s9 + $0x60] sm:$0xf]
    %v3266 = vld [vmem:[%s9 + $0x64] sm:$0xf]
    %v3267 = vld [vmem:[%s9 + $0x68] sm:$0xf]
    %v3268 = vld [vmem:[%s9 + $0x6c] sm:$0xf]
    %v3269 = vld [vmem:[%s9 + $0x70] sm:$0xf]
    %v3270 = vld [vmem:[%s9 + $0x74] sm:$0xf]
    %v3271 = vld [vmem:[%s9 + $0x78] sm:$0xf]
    %v3272 = vld [vmem:[%s9 + $0x7c] sm:$0xf]
    %v3273 = vld [vmem:[%s9 + $0x80] sm:$0xf]
    %v3274 = vld [vmem:[%s9 + $0x84] sm:$0xf]
    %v3275 = vld [vmem:[%s9 + $0x88] sm:$0xf]
    %v3276 = vld [vmem:[%s9 + $0x8c] sm:$0xf]
    %v3277 = vld [vmem:[%s9 + $0x90] sm:$0xf]
    %v3278 = vld [vmem:[%s9 + $0x94] sm:$0xf]
    %v3279 = vld [vmem:[%s9 + $0x98] sm:$0xf]
    %v3280 = vld [vmem:[%s9 + $0x9c] sm:$0xf]
    %v3281 = vld [vmem:[%s9 + $0xa0] sm:$0xf]
    %v3282 = vld [vmem:[%s9 + $0xa4] sm:$0xf]
    %v3283 = vld [vmem:[%s9 + $0xa8] sm:$0xf]
    %v3284 = vld [vmem:[%s9 + $0xac] sm:$0xf]
    %v3285 = vld [vmem:[%s9 + $0xb0] sm:$0xf]
    %v3286 = vld [vmem:[%s9 + $0xb4] sm:$0xf]
    %v3287 = vld [vmem:[%s9 + $0xb8] sm:$0xf]
    %v3288 = vld [vmem:[%s9 + $0xbc] sm:$0xf]
    %v3289 = vld [vmem:[%s9 + $0xc0] sm:$0xf]
    %v3290 = vld [vmem:[%s9 + $0xc4] sm:$0xf]
    %v3291 = vld [vmem:[%s9 + $0xc8] sm:$0xf]
    %v3292 = vld [vmem:[%s9 + $0xcc] sm:$0xf]
    %v3293 = vld [vmem:[%s9 + $0xd0] sm:$0xf]
    %v3294 = vld [vmem:[%s9 + $0xd4] sm:$0xf]
    %v3295 = vld [vmem:[%s9 + $0xd8] sm:$0xf]
    %v3296 = vld [vmem:[%s9 + $0xdc] sm:$0xf]
    %v3297 = vld [vmem:[%s9 + $0xe0] sm:$0xf]
    %v3298 = vld [vmem:[%s9 + $0xe4] sm:$0xf]
    %v3299 = vld [vmem:[%s9 + $0xe8] sm:$0xf]
    %v3300 = vld [vmem:[%s9 + $0xec] sm:$0xf]
    %v3301 = vld [vmem:[%s9 + $0xf0] sm:$0xf]
    %v3302 = vld [vmem:[%s9 + $0xf4] sm:$0xf]
    %v3303 = vld [vmem:[%s9 + $0xf8] sm:$0xf]
    %v3304 = vld [vmem:[%s9 + $0xfc] sm:$0xf]
    %v3305 = vld [vmem:[%s10] sm:$0x1]
    %v3307 = vperm.slane %v3305, 0
    %v3373 = vunpack.c.l.b16 %v3241
    %v3374 = vunpack.c.l.b16 %v3242
    %v3375 = vunpack.c.l.b16 %v3243
    %v3376 = vunpack.c.l.b16 %v3244
    %v3377 = vunpack.c.l.b16 %v3245
    %v3378 = vunpack.c.l.b16 %v3246
    %v3379 = vunpack.c.l.b16 %v3247
    %v3380 = vunpack.c.l.b16 %v3248
    %v3381 = vunpack.c.l.b16 %v3249
    %v3382 = vunpack.c.l.b16 %v3250
    %v3383 = vunpack.c.l.b16 %v3251
    %v3384 = vunpack.c.l.b16 %v3252
    %v3385 = vunpack.c.l.b16 %v3253
    %v3386 = vunpack.c.l.b16 %v3254
    %v3387 = vunpack.c.l.b16 %v3255
    %v3388 = vunpack.c.l.b16 %v3256
    %v3389 = vunpack.c.l.b16 %v3257
    %v3390 = vunpack.c.l.b16 %v3258
    %v3391 = vunpack.c.l.b16 %v3259
    %v3392 = vunpack.c.l.b16 %v3260
    %v3393 = vunpack.c.l.b16 %v3261
    %v3394 = vunpack.c.l.b16 %v3262
    %v3395 = vunpack.c.l.b16 %v3263
    %v3396 = vunpack.c.l.b16 %v3264
    %v3397 = vunpack.c.l.b16 %v3265
    %v3398 = vunpack.c.l.b16 %v3266
    %v3399 = vunpack.c.l.b16 %v3267
    %v3400 = vunpack.c.l.b16 %v3268
    %v3401 = vunpack.c.l.b16 %v3269
    %v3402 = vunpack.c.l.b16 %v3270
    %v3403 = vunpack.c.l.b16 %v3271
    %v3404 = vunpack.c.l.b16 %v3272
    %v3405 = vunpack.c.l.b16 %v3273
    %v3406 = vunpack.c.l.b16 %v3274
    %v3407 = vunpack.c.l.b16 %v3275
    %v3408 = vunpack.c.l.b16 %v3276
    %v3409 = vunpack.c.l.b16 %v3277
    %v3410 = vunpack.c.l.b16 %v3278
    %v3411 = vunpack.c.l.b16 %v3279
    %v3412 = vunpack.c.l.b16 %v3280
    %v3413 = vunpack.c.l.b16 %v3281
    %v3414 = vunpack.c.l.b16 %v3282
    %v3415 = vunpack.c.l.b16 %v3283
    %v3416 = vunpack.c.l.b16 %v3284
    %v3417 = vunpack.c.l.b16 %v3285
    %v3418 = vunpack.c.l.b16 %v3286
    %v3419 = vunpack.c.l.b16 %v3287
    %v3420 = vunpack.c.l.b16 %v3288
    %v3421 = vunpack.c.l.b16 %v3289
    %v3422 = vunpack.c.l.b16 %v3290
    %v3423 = vunpack.c.l.b16 %v3291
    %v3424 = vunpack.c.l.b16 %v3292
    %v3425 = vunpack.c.l.b16 %v3293
    %v3426 = vunpack.c.l.b16 %v3294
    %v3427 = vunpack.c.l.b16 %v3295
    %v3428 = vunpack.c.l.b16 %v3296
    %v3429 = vunpack.c.l.b16 %v3297
    %v3430 = vunpack.c.l.b16 %v3298
    %v3431 = vunpack.c.l.b16 %v3299
    %v3432 = vunpack.c.l.b16 %v3300
    %v3433 = vunpack.c.l.b16 %v3301
    %v3434 = vunpack.c.l.b16 %v3302
    %v3435 = vunpack.c.l.b16 %v3303
    %v3436 = vunpack.c.l.b16 %v3304
    %v3437 = vpack.c.b16 %v3374, %v3373
    %v3438 = vpack.c.b16 %v3376, %v3375
    %v3439 = vpack.c.b16 %v3378, %v3377
    %v3440 = vpack.c.b16 %v3380, %v3379
    %v3441 = vpack.c.b16 %v3382, %v3381
    %v3442 = vpack.c.b16 %v3384, %v3383
    %v3443 = vpack.c.b16 %v3386, %v3385
    %v3444 = vpack.c.b16 %v3388, %v3387
    %v3445 = vpack.c.b16 %v3390, %v3389
    %v3446 = vpack.c.b16 %v3392, %v3391
    %v3447 = vpack.c.b16 %v3394, %v3393
    %v3448 = vpack.c.b16 %v3396, %v3395
    %v3449 = vpack.c.b16 %v3398, %v3397
    %v3450 = vpack.c.b16 %v3400, %v3399
    %v3451 = vpack.c.b16 %v3402, %v3401
    %v3452 = vpack.c.b16 %v3404, %v3403
    %v3453 = vpack.c.b16 %v3406, %v3405
    %v3454 = vpack.c.b16 %v3408, %v3407
    %v3455 = vpack.c.b16 %v3410, %v3409
    %v3456 = vpack.c.b16 %v3412, %v3411
    %v3457 = vpack.c.b16 %v3414, %v3413
    %v3458 = vpack.c.b16 %v3416, %v3415
    %v3459 = vpack.c.b16 %v3418, %v3417
    %v3460 = vpack.c.b16 %v3420, %v3419
    %v3461 = vpack.c.b16 %v3422, %v3421
    %v3462 = vpack.c.b16 %v3424, %v3423
    %v3463 = vpack.c.b16 %v3426, %v3425
    %v3464 = vpack.c.b16 %v3428, %v3427
    %v3465 = vpack.c.b16 %v3430, %v3429
    %v3466 = vpack.c.b16 %v3432, %v3431
    %v3467 = vpack.c.b16 %v3434, %v3433
    %v3468 = vpack.c.b16 %v3436, %v3435
    %3501 = vmatpush.bf16.msra.mxu0 %v3444
    %3502 = vmatpush.bf16.msra.mxu0 %v3443
    %3503 = vmatpush.bf16.msra.mxu0 %v3442
    %3504 = vmatpush.bf16.msra.mxu0 %v3441
    %3505 = vmatpush.bf16.msra.mxu0 %v3440
    %3506 = vmatpush.bf16.msra.mxu0 %v3439
    %3507 = vmatpush.bf16.msra.mxu0 %v3438
    %3508 = vmatpush.bf16.msra.mxu0 %v3437
    %3509 = vmatmul.bf16.gmra.mxu0 %v3237
    %v3510 = vpop.f32.mrf.mxu0
    %v3511 = vadd.f32 %v3307, %v3510
    %v3512 = vpop.f32.mrf.mxu0
    %v3513 = vadd.f32 %v3307, %v3512
    %3514 = vdwg.mxu0
    %3515 = vmatpush.bf16.msra.mxu0 %v3452
    %3516 = vmatpush.bf16.msra.mxu0 %v3451
    %3517 = vmatpush.bf16.msra.mxu0 %v3450
    %3518 = vmatpush.bf16.msra.mxu0 %v3449
    %3519 = vmatpush.bf16.msra.mxu0 %v3448
    %3520 = vmatpush.bf16.msra.mxu0 %v3447
    %3521 = vmatpush.bf16.msra.mxu0 %v3446
    %3522 = vmatpush.bf16.msra.mxu0 %v3445
    %3523 = vmatmul.bf16.gmra.mxu0 %v3238
    %v3524 = vpop.f32.mrf.mxu0
    %v3525 = vadd.f32 %v3511, %v3524
    %v3526 = vpop.f32.mrf.mxu0
    %v3527 = vadd.f32 %v3513, %v3526
    %3528 = vdwg.mxu0
    %3529 = vmatpush.bf16.msra.mxu0 %v3460
    %3530 = vmatpush.bf16.msra.mxu0 %v3459
    %3531 = vmatpush.bf16.msra.mxu0 %v3458
    %3532 = vmatpush.bf16.msra.mxu0 %v3457
    %3533 = vmatpush.bf16.msra.mxu0 %v3456
    %3534 = vmatpush.bf16.msra.mxu0 %v3455
    %3535 = vmatpush.bf16.msra.mxu0 %v3454
    %3536 = vmatpush.bf16.msra.mxu0 %v3453
    %3537 = vmatmul.bf16.gmra.mxu0 %v3239
    %v3538 = vpop.f32.mrf.mxu0
    %v3539 = vadd.f32 %v3525, %v3538
    %v3540 = vpop.f32.mrf.mxu0
    %v3541 = vadd.f32 %v3527, %v3540
    %3542 = vdwg.mxu0
    %3543 = vmatpush.bf16.msra.mxu0 %v3468
    %3544 = vmatpush.bf16.msra.mxu0 %v3467
    %3545 = vmatpush.bf16.msra.mxu0 %v3466
    %3546 = vmatpush.bf16.msra.mxu0 %v3465
    %3547 = vmatpush.bf16.msra.mxu0 %v3464
    %3548 = vmatpush.bf16.msra.mxu0 %v3463
    %3549 = vmatpush.bf16.msra.mxu0 %v3462
    %3550 = vmatpush.bf16.msra.mxu0 %v3461
    %3551 = vmatmul.bf16.gmra.mxu0 %v3240
    %v3552 = vpop.f32.mrf.mxu0
    %v3553 = vadd.f32 %v3539, %v3552
    %v3554 = vpop.f32.mrf.mxu0
    %v3555 = vadd.f32 %v3541, %v3554
    %3556 = vdwg.mxu0
    %vm3557 = vcmask 64512
    %3558 = vst.msk [vmem:[%s11] sm:$0xff] %vm3557, %v3553
    %3559 = vst.msk [vmem:[%s11 + $0x8] sm:$0xff] %vm3557, %v3555
    // Predicated region
    $region58: #{dqn_forward.1} parent=1 // pred_check
      _
    $region59: #{dqn_forward.1} parent=1 // pred_check_branch
      %3561 = sbr.rel (0) target = $region61
    $region60: #{dqn_forward.1} parent=1 // pred_region
      _
    $region61: #{dqn_forward.1} parent=1 // pred_fallthru
      _
    // Predicated region
    $region62: #{dqn_forward.1} parent=1 // pred_check
      _
    $region63: #{dqn_forward.1} parent=1 // pred_check_branch
      %3563 = sbr.rel (0) target = $region65
    $region64: #{dqn_forward.1} parent=1 // pred_region
      _
    $region65: #{dqn_forward.1} parent=1 // pred_fallthru
      _
    %3564 = vsyncpa [#allocation3], 1
    %3565 = vsyncpa [#allocation5], 1

</llo_original>
